<compile_context>
chip_gen: v7x
topology: tpu7x:2x2x1
jax: 0.10.0
libtpu: 0.0.40
codegen_flags: <defaults>
</compile_context>

<pallas_src>
import functools

import jax
import jax.numpy as jnp
import numpy as np
from jax.experimental import pallas as pl
from jax.experimental.pallas import tpu as pltpu


def bottleneck_kernel(x_ref, w1_ref, b1_ref, w2_ref, b2_ref, w3_ref, b3_ref,
                      o_ref, pad_ref, *, H, W):
    # x_ref : (1, H*W, Cin)   bf16
    # w1_ref: (Cin, P)  bf16     b1_ref: (1, P)    f32
    # w2_ref: (9P, P)   bf16     b2_ref: (1, P)    f32
    # w3_ref: (P, Cout) bf16     b3_ref: (1, Cout) f32
    # o_ref : (1, H*W, Cout)  bf16
    # pad_ref: (3, H*W + 2W, P) bf16 scratch -- row-padded, column-shifted h1 slabs
    M = H * W
    P = w1_ref.shape[1]

    x2d = x_ref[0]                                           # (M, Cin) bf16

    # ---- conv1 (1x1, BN scale folded into w1) + bias + relu -----------------
    h1 = jnp.dot(x2d, w1_ref[...], preferred_element_type=jnp.float32)
    h1 = jnp.maximum(h1 + b1_ref[...], 0.0)                  # (M, P) f32

    # ---- conv2 (3x3, pad=1) as one im2col matmul ----------------------------
    # Column-border masks (x == 0 / x == W-1), built from a 2-D+ iota.
    wi = jax.lax.broadcasted_iota(jnp.int32, (H, W, P), 1)
    not_l = (wi > 0).astype(jnp.float32).reshape(M, P)       # 0 where x == 0
    not_r = (wi < W - 1).astype(jnp.float32).reshape(M, P)   # 0 where x == W-1

    # Three slabs of h1, each row-padded by W zero rows top/bottom.  The +/-1
    # column shift is realized purely by the store offset; the pre-multiplied
    # masks zero the positions that would otherwise wrap across image rows.
    Mp = M + 2 * W
    zpad = jnp.zeros((W + 1, P), pad_ref.dtype)
    for s in range(3):
        pad_ref[s, 0:W + 1] = zpad                 # top border
        pad_ref[s, Mp - (W + 1):Mp] = zpad         # bottom border
    # slab 0: left-neighbour values  (read back as h1[y, x-1])
    pad_ref[0, W + 1:W + 1 + M] = (h1 * not_r).astype(pad_ref.dtype)
    # slab 1: centre values
    pad_ref[1, W:W + M] = h1.astype(pad_ref.dtype)
    # slab 2: right-neighbour values (read back as h1[y, x+1])
    pad_ref[2, W - 1:W - 1 + M] = (h1 * not_l).astype(pad_ref.dtype)

    # Tap (ky, kx) = h1 shifted by (ky-1, kx-1); every read below starts at an
    # 8-aligned sublane offset (0, W, 2W).  Order matches w2's (ky,kx,cin) rows.
    taps = [pad_ref[kx, ky * W:ky * W + M]
            for ky in range(3) for kx in range(3)]
    patch = jnp.concatenate(taps, axis=1)                    # (M, 9P) bf16
    h2 = jnp.dot(patch, w2_ref[...], preferred_element_type=jnp.float32)
    h2 = jnp.maximum(h2 + b2_ref[...], 0.0)                  # (M, P) f32

    # ---- conv3 (1x1, BN folded) + bias + residual + relu --------------------
    h3 = jnp.dot(h2.astype(jnp.bfloat16), w3_ref[...],
                 preferred_element_type=jnp.float32)         # (M, Cout) f32
    out = jnp.maximum(h3 + b3_ref[...] + x2d.astype(jnp.float32), 0.0)
    o_ref[0] = out.astype(o_ref.dtype)


def bottleneck_forward(x_nchw, w1, b1, w2, b2, w3, b3):
    N, Cin, H, W = x_nchw.shape
    P = w1.shape[1]
    Cout = w3.shape[1]
    assert Cin == Cout, "stride=1 / downsample=None requires inplanes == 4*planes"
    M = H * W

    # NCHW -> lane-dense (N, H*W, C), bf16 I/O (halves HBM bytes, 2x MXU rate).
    x = jnp.transpose(x_nchw, (0, 2, 3, 1)).reshape(N, M, Cin).astype(jnp.bfloat16)

    def full(a):
        nd = a.ndim
        return pl.BlockSpec(a.shape, lambda n, _nd=nd: (0,) * _nd)

    kernel = functools.partial(bottleneck_kernel, H=H, W=W)
    out = pl.pallas_call(
        kernel,
        out_shape=jax.ShapeDtypeStruct((N, M, Cout), jnp.bfloat16),
        grid=(N,),
        in_specs=[
            pl.BlockSpec((1, M, Cin), lambda n: (n, 0, 0)),
            full(w1), full(b1), full(w2), full(b2), full(w3), full(b3),
        ],
        out_specs=pl.BlockSpec((1, M, Cout), lambda n: (n, 0, 0)),
        scratch_shapes=[pltpu.VMEM((3, M + 2 * W, P), jnp.bfloat16)],
        compiler_params=pltpu.CompilerParams(
            dimension_semantics=("parallel",),   # v7x: shard batch over 2 TCs
            vmem_limit_bytes=32 * 1024 * 1024,
        ),
    )(x, w1, b1, w2, b2, w3, b3)

    out = out.reshape(N, H, W, Cout)
    return jnp.transpose(out, (0, 3, 1, 2)).astype(jnp.float32)   # back to NCHW


# ------------------------- parameter construction ----------------------------
def init_raw_params(key, inplanes, planes):
    ks = jax.random.split(key, 15)
    # PyTorch conv weight layouts (OIHW), no bias.
    cw1 = 0.1 * jax.random.normal(ks[0], (planes, inplanes, 1, 1), jnp.float32)
    cw2 = 0.1 * jax.random.normal(ks[1], (planes, planes, 3, 3), jnp.float32)
    cw3 = 0.1 * jax.random.normal(ks[2], (planes * 4, planes, 1, 1), jnp.float32)

    def bn(kg, kb, km, kv, c):
        gamma = 1.0 + 0.1 * jax.random.normal(kg, (c,), jnp.float32)
        beta = 0.1 * jax.random.normal(kb, (c,), jnp.float32)
        mean = 0.1 * jax.random.normal(km, (c,), jnp.float32)
        var = jnp.abs(jax.random.normal(kv, (c,), jnp.float32)) + 0.5
        return gamma, beta, mean, var

    bn1 = bn(ks[3], ks[4], ks[5], ks[6], planes)
    bn2 = bn(ks[7], ks[8], ks[9], ks[10], planes)
    bn3 = bn(ks[11], ks[12], ks[13], ks[14], planes * 4)
    return cw1, cw2, cw3, bn1, bn2, bn3


def prepare_params(cw1, cw2, cw3, bn1, bn2, bn3, eps=1e-5):
    """Fold eval-mode BN into the conv weights; return bf16 weights + f32 biases."""
    P = cw1.shape[0]

    def fold(bnp):
        g, b, m, v = bnp
        s = g / jnp.sqrt(v + eps)
        return s, b - m * s

    s1, b1 = fold(bn1)
    s2, b2 = fold(bn2)
    s3, b3 = fold(bn3)

    # conv1: (P, Cin, 1, 1) OIHW -> (Cin, P), scale folded per output channel.
    w1 = (cw1[:, :, 0, 0] * s1[:, None]).T.astype(jnp.bfloat16)
    # conv2: OIHW -> (ky, kx, cin, cout) -> (9P, P); row = (ky*3+kx)*P + cin.
    w2 = jnp.transpose(cw2 * s2[:, None, None, None],
                       (2, 3, 1, 0)).reshape(9 * P, P).astype(jnp.bfloat16)
    # conv3: (4P, P, 1, 1) -> (P, 4P).
    w3 = (cw3[:, :, 0, 0] * s3[:, None]).T.astype(jnp.bfloat16)

    b1 = b1.reshape(1, -1).astype(jnp.float32)
    b2 = b2.reshape(1, -1).astype(jnp.float32)
    b3 = b3.reshape(1, -1).astype(jnp.float32)
    return w1, b1, w2, b2, w3, b3


# --------------------------- pure-JAX reference -------------------------------
def reference(x, cw1, cw2, cw3, bn1, bn2, bn3, eps=1e-5):
    def bn_apply(y, p):
        g, b, m, v = p
        rs = lambda a: a[None, :, None, None]
        return (y - rs(m)) / jnp.sqrt(rs(v) + eps) * rs(g) + rs(b)

    conv = lambda a, w, pad: jax.lax.conv_general_dilated(
        a, w, (1, 1), pad, dimension_numbers=("NCHW", "OIHW", "NCHW"),
        precision=jax.lax.Precision.HIGHEST)

    out = jax.nn.relu(bn_apply(conv(x, cw1, "VALID"), bn1))
    out = jax.nn.relu(bn_apply(conv(out, cw2, "SAME"), bn2))
    out = bn_apply(conv(out, cw3, "VALID"), bn3)
    return jax.nn.relu(out + x)


if __name__ == "__main__":
    key = jax.random.PRNGKey(0)
    planes = 4
    inplanes = planes * 4          # downsample=None => inplanes == planes * expansion
    N, H, W = 2, 16, 16

    kx_, kp = jax.random.split(key)
    x = jax.random.normal(kx_, (N, inplanes, H, W), jnp.float32)

    raw = init_raw_params(kp, inplanes, planes)
    kernel_params = prepare_params(*raw)

    y = bottleneck_forward(x, *kernel_params)
    y = jax.block_until_ready(y)

    y_ref = reference(x, *raw)
    # Kernel runs with bf16 activations/weights; compare against the f32
    # reference with a bf16-appropriate tolerance.
    np.testing.assert_allclose(np.asarray(y), np.asarray(y_ref),
                               rtol=3e-2, atol=3e-2)
    print("KERNEL_OK")
</pallas_src>

<mosaic_0001>
module attributes {stable_mosaic.version = 11 : i64} {
  func.func @bottleneck_kernel(%arg0: i32, %arg1: memref<1x256x16xbf16, #tpu.memory_space<vmem>>, %arg2: memref<16x4xbf16, #tpu.memory_space<vmem>>, %arg3: memref<1x4xf32, #tpu.memory_space<vmem>>, %arg4: memref<36x4xbf16, #tpu.memory_space<vmem>>, %arg5: memref<1x4xf32, #tpu.memory_space<vmem>>, %arg6: memref<4x16xbf16, #tpu.memory_space<vmem>>, %arg7: memref<1x16xf32, #tpu.memory_space<vmem>>, %arg8: memref<1x256x16xbf16, #tpu.memory_space<vmem>>, %arg9: memref<3x288x4xbf16, #tpu.memory_space<vmem>>) attributes {dimension_semantics = [#tpu.dimension_semantics<parallel>], iteration_bounds = array<i64: 2>, scalar_prefetch = 0 : i64, scratch_operands = 1 : i64, tpu.core_type = #tpu.core_type<tc>, window_params = [{transform_indices = @transform_0, window_bounds = array<i64: 1, 256, 16>}, {pipeline_mode = #tpu.pipeline_mode<synchronous>, transform_indices = @transform_1, window_bounds = array<i64: 16, 4>}, {pipeline_mode = #tpu.pipeline_mode<synchronous>, transform_indices = @transform_2, window_bounds = array<i64: 1, 4>}, {pipeline_mode = #tpu.pipeline_mode<synchronous>, transform_indices = @transform_3, window_bounds = array<i64: 36, 4>}, {pipeline_mode = #tpu.pipeline_mode<synchronous>, transform_indices = @transform_4, window_bounds = array<i64: 1, 4>}, {pipeline_mode = #tpu.pipeline_mode<synchronous>, transform_indices = @transform_5, window_bounds = array<i64: 4, 16>}, {pipeline_mode = #tpu.pipeline_mode<synchronous>, transform_indices = @transform_6, window_bounds = array<i64: 1, 16>}, {transform_indices = @transform_7, window_bounds = array<i64: 1, 256, 16>}]} {
    %c0 = arith.constant 0 : index
    %c0_0 = arith.constant 0 : index
    %c0_1 = arith.constant 0 : index
    %0 = vector.load %arg1[%c0, %c0_0, %c0_1] : memref<1x256x16xbf16, #tpu.memory_space<vmem>>, vector<1x256x16xbf16>
    %1 = vector.shape_cast %0 : vector<1x256x16xbf16> to vector<256x16xbf16>
    %c0_2 = arith.constant 0 : index
    %c0_3 = arith.constant 0 : index
    %2 = vector.load %arg2[%c0_2, %c0_3] : memref<16x4xbf16, #tpu.memory_space<vmem>>, vector<16x4xbf16>
    %cst = arith.constant dense<0.000000e+00> : vector<256x4xf32>
    %3 = tpu.matmul %1, %2, %cst {dimension_numbers = #tpu.dot_dimension_numbers<[1], [0], [0], [1], [0, 0, 1, 1], [], []>} : vector<256x16xbf16>, vector<16x4xbf16>, vector<256x4xf32> -> vector<256x4xf32>
    %c0_4 = arith.constant 0 : index
    %c0_5 = arith.constant 0 : index
    %4 = vector.load %arg3[%c0_4, %c0_5] : memref<1x4xf32, #tpu.memory_space<vmem>>, vector<1x4xf32>
    %5 = vector.broadcast %4 : vector<1x4xf32> to vector<256x4xf32>
    %6 = arith.addf %3, %5 : vector<256x4xf32>
    %cst_6 = arith.constant 0.000000e+00 : f32
    %7 = vector.broadcast %cst_6 : f32 to vector<256x4xf32>
    %8 = arith.maximumf %6, %7 : vector<256x4xf32>
    %9 = tpu.iota {dimensions = array<i32: 1>} : vector<16x16x4xi32>
    %c0_i32 = arith.constant 0 : i32
    %10 = vector.broadcast %c0_i32 : i32 to vector<16x16x4xi32>
    %11 = arith.cmpi sgt, %9, %10 : vector<16x16x4xi32>
    %12 = arith.extui %11 : vector<16x16x4xi1> to vector<16x16x4xi32>
    %13 = arith.sitofp %12 : vector<16x16x4xi32> to vector<16x16x4xf32>
    %14 = vector.shape_cast %13 : vector<16x16x4xf32> to vector<256x4xf32>
    %c15_i32 = arith.constant 15 : i32
    %15 = vector.broadcast %c15_i32 : i32 to vector<16x16x4xi32>
    %16 = arith.cmpi slt, %9, %15 : vector<16x16x4xi32>
    %17 = arith.extui %16 : vector<16x16x4xi1> to vector<16x16x4xi32>
    %18 = arith.sitofp %17 : vector<16x16x4xi32> to vector<16x16x4xf32>
    %19 = vector.shape_cast %18 : vector<16x16x4xf32> to vector<256x4xf32>
    %cst_7 = arith.constant 0.000000e+00 : bf16
    %20 = vector.broadcast %cst_7 : bf16 to vector<17x4xbf16>
    %c0_8 = arith.constant 0 : index
    %c0_9 = arith.constant 0 : index
    %c0_10 = arith.constant 0 : index
    %21 = vector.load %arg9[%c0_8, %c0_9, %c0_10] : memref<3x288x4xbf16, #tpu.memory_space<vmem>>, vector<1x17x4xbf16>
    %22 = vector.shape_cast %21 : vector<1x17x4xbf16> to vector<17x4xbf16>
    %23 = vector.shape_cast %20 : vector<17x4xbf16> to vector<1x17x4xbf16>
    tpu.vector_store %arg9[%c0_8, %c0_9, %c0_10], %23 {strides = array<i32>} : memref<3x288x4xbf16, #tpu.memory_space<vmem>>, vector<1x17x4xbf16>,
    %c0_11 = arith.constant 0 : index
    %c271 = arith.constant 271 : index
    %c0_12 = arith.constant 0 : index
    %24 = vector.load %arg9[%c0_11, %c271, %c0_12] : memref<3x288x4xbf16, #tpu.memory_space<vmem>>, vector<1x17x4xbf16>
    %25 = vector.shape_cast %24 : vector<1x17x4xbf16> to vector<17x4xbf16>
    %26 = vector.shape_cast %20 : vector<17x4xbf16> to vector<1x17x4xbf16>
    tpu.vector_store %arg9[%c0_11, %c271, %c0_12], %26 {strides = array<i32>} : memref<3x288x4xbf16, #tpu.memory_space<vmem>>, vector<1x17x4xbf16>,
    %c1 = arith.constant 1 : index
    %c0_13 = arith.constant 0 : index
    %c0_14 = arith.constant 0 : index
    %27 = vector.load %arg9[%c1, %c0_13, %c0_14] : memref<3x288x4xbf16, #tpu.memory_space<vmem>>, vector<1x17x4xbf16>
    %28 = vector.shape_cast %27 : vector<1x17x4xbf16> to vector<17x4xbf16>
    %29 = vector.shape_cast %20 : vector<17x4xbf16> to vector<1x17x4xbf16>
    tpu.vector_store %arg9[%c1, %c0_13, %c0_14], %29 {strides = array<i32>} : memref<3x288x4xbf16, #tpu.memory_space<vmem>>, vector<1x17x4xbf16>,
    %c1_15 = arith.constant 1 : index
    %c271_16 = arith.constant 271 : index
    %c0_17 = arith.constant 0 : index
    %30 = vector.load %arg9[%c1_15, %c271_16, %c0_17] : memref<3x288x4xbf16, #tpu.memory_space<vmem>>, vector<1x17x4xbf16>
    %31 = vector.shape_cast %30 : vector<1x17x4xbf16> to vector<17x4xbf16>
    %32 = vector.shape_cast %20 : vector<17x4xbf16> to vector<1x17x4xbf16>
    tpu.vector_store %arg9[%c1_15, %c271_16, %c0_17], %32 {strides = array<i32>} : memref<3x288x4xbf16, #tpu.memory_space<vmem>>, vector<1x17x4xbf16>,
    %c2 = arith.constant 2 : index
    %c0_18 = arith.constant 0 : index
    %c0_19 = arith.constant 0 : index
    %33 = vector.load %arg9[%c2, %c0_18, %c0_19] : memref<3x288x4xbf16, #tpu.memory_space<vmem>>, vector<1x17x4xbf16>
    %34 = vector.shape_cast %33 : vector<1x17x4xbf16> to vector<17x4xbf16>
    %35 = vector.shape_cast %20 : vector<17x4xbf16> to vector<1x17x4xbf16>
    tpu.vector_store %arg9[%c2, %c0_18, %c0_19], %35 {strides = array<i32>} : memref<3x288x4xbf16, #tpu.memory_space<vmem>>, vector<1x17x4xbf16>,
    %c2_20 = arith.constant 2 : index
    %c271_21 = arith.constant 271 : index
    %c0_22 = arith.constant 0 : index
    %36 = vector.load %arg9[%c2_20, %c271_21, %c0_22] : memref<3x288x4xbf16, #tpu.memory_space<vmem>>, vector<1x17x4xbf16>
    %37 = vector.shape_cast %36 : vector<1x17x4xbf16> to vector<17x4xbf16>
    %38 = vector.shape_cast %20 : vector<17x4xbf16> to vector<1x17x4xbf16>
    tpu.vector_store %arg9[%c2_20, %c271_21, %c0_22], %38 {strides = array<i32>} : memref<3x288x4xbf16, #tpu.memory_space<vmem>>, vector<1x17x4xbf16>,
    %39 = arith.mulf %8, %19 : vector<256x4xf32>
    %40 = arith.truncf %39 : vector<256x4xf32> to vector<256x4xbf16>
    %c0_23 = arith.constant 0 : index
    %c17 = arith.constant 17 : index
    %c0_24 = arith.constant 0 : index
    %41 = vector.load %arg9[%c0_23, %c17, %c0_24] : memref<3x288x4xbf16, #tpu.memory_space<vmem>>, vector<1x256x4xbf16>
    %42 = vector.shape_cast %41 : vector<1x256x4xbf16> to vector<256x4xbf16>
    %43 = vector.shape_cast %40 : vector<256x4xbf16> to vector<1x256x4xbf16>
    tpu.vector_store %arg9[%c0_23, %c17, %c0_24], %43 {strides = array<i32>} : memref<3x288x4xbf16, #tpu.memory_space<vmem>>, vector<1x256x4xbf16>,
    %44 = arith.truncf %8 : vector<256x4xf32> to vector<256x4xbf16>
    %c1_25 = arith.constant 1 : index
    %c16 = arith.constant 16 : index
    %c0_26 = arith.constant 0 : index
    %45 = vector.load %arg9[%c1_25, %c16, %c0_26] : memref<3x288x4xbf16, #tpu.memory_space<vmem>>, vector<1x256x4xbf16>
    %46 = vector.shape_cast %45 : vector<1x256x4xbf16> to vector<256x4xbf16>
    %47 = vector.shape_cast %44 : vector<256x4xbf16> to vector<1x256x4xbf16>
    tpu.vector_store %arg9[%c1_25, %c16, %c0_26], %47 {strides = array<i32>} : memref<3x288x4xbf16, #tpu.memory_space<vmem>>, vector<1x256x4xbf16>,
    %48 = arith.mulf %8, %14 : vector<256x4xf32>
    %49 = arith.truncf %48 : vector<256x4xf32> to vector<256x4xbf16>
    %c2_27 = arith.constant 2 : index
    %c15 = arith.constant 15 : index
    %c0_28 = arith.constant 0 : index
    %50 = vector.load %arg9[%c2_27, %c15, %c0_28] : memref<3x288x4xbf16, #tpu.memory_space<vmem>>, vector<1x256x4xbf16>
    %51 = vector.shape_cast %50 : vector<1x256x4xbf16> to vector<256x4xbf16>
    %52 = vector.shape_cast %49 : vector<256x4xbf16> to vector<1x256x4xbf16>
    tpu.vector_store %arg9[%c2_27, %c15, %c0_28], %52 {strides = array<i32>} : memref<3x288x4xbf16, #tpu.memory_space<vmem>>, vector<1x256x4xbf16>,
    %c0_29 = arith.constant 0 : index
    %c0_30 = arith.constant 0 : index
    %c0_31 = arith.constant 0 : index
    %53 = vector.load %arg9[%c0_29, %c0_30, %c0_31] : memref<3x288x4xbf16, #tpu.memory_space<vmem>>, vector<1x256x4xbf16>
    %54 = vector.shape_cast %53 : vector<1x256x4xbf16> to vector<256x4xbf16>
    %c1_32 = arith.constant 1 : index
    %c0_33 = arith.constant 0 : index
    %c0_34 = arith.constant 0 : index
    %55 = vector.load %arg9[%c1_32, %c0_33, %c0_34] : memref<3x288x4xbf16, #tpu.memory_space<vmem>>, vector<1x256x4xbf16>
    %56 = vector.shape_cast %55 : vector<1x256x4xbf16> to vector<256x4xbf16>
    %c2_35 = arith.constant 2 : index
    %c0_36 = arith.constant 0 : index
    %c0_37 = arith.constant 0 : index
    %57 = vector.load %arg9[%c2_35, %c0_36, %c0_37] : memref<3x288x4xbf16, #tpu.memory_space<vmem>>, vector<1x256x4xbf16>
    %58 = vector.shape_cast %57 : vector<1x256x4xbf16> to vector<256x4xbf16>
    %c0_38 = arith.constant 0 : index
    %c16_39 = arith.constant 16 : index
    %c0_40 = arith.constant 0 : index
    %59 = vector.load %arg9[%c0_38, %c16_39, %c0_40] : memref<3x288x4xbf16, #tpu.memory_space<vmem>>, vector<1x256x4xbf16>
    %60 = vector.shape_cast %59 : vector<1x256x4xbf16> to vector<256x4xbf16>
    %c1_41 = arith.constant 1 : index
    %c16_42 = arith.constant 16 : index
    %c0_43 = arith.constant 0 : index
    %61 = vector.load %arg9[%c1_41, %c16_42, %c0_43] : memref<3x288x4xbf16, #tpu.memory_space<vmem>>, vector<1x256x4xbf16>
    %62 = vector.shape_cast %61 : vector<1x256x4xbf16> to vector<256x4xbf16>
    %c2_44 = arith.constant 2 : index
    %c16_45 = arith.constant 16 : index
    %c0_46 = arith.constant 0 : index
    %63 = vector.load %arg9[%c2_44, %c16_45, %c0_46] : memref<3x288x4xbf16, #tpu.memory_space<vmem>>, vector<1x256x4xbf16>
    %64 = vector.shape_cast %63 : vector<1x256x4xbf16> to vector<256x4xbf16>
    %c0_47 = arith.constant 0 : index
    %c32 = arith.constant 32 : index
    %c0_48 = arith.constant 0 : index
    %65 = vector.load %arg9[%c0_47, %c32, %c0_48] : memref<3x288x4xbf16, #tpu.memory_space<vmem>>, vector<1x256x4xbf16>
    %66 = vector.shape_cast %65 : vector<1x256x4xbf16> to vector<256x4xbf16>
    %c1_49 = arith.constant 1 : index
    %c32_50 = arith.constant 32 : index
    %c0_51 = arith.constant 0 : index
    %67 = vector.load %arg9[%c1_49, %c32_50, %c0_51] : memref<3x288x4xbf16, #tpu.memory_space<vmem>>, vector<1x256x4xbf16>
    %68 = vector.shape_cast %67 : vector<1x256x4xbf16> to vector<256x4xbf16>
    %c2_52 = arith.constant 2 : index
    %c32_53 = arith.constant 32 : index
    %c0_54 = arith.constant 0 : index
    %69 = vector.load %arg9[%c2_52, %c32_53, %c0_54] : memref<3x288x4xbf16, #tpu.memory_space<vmem>>, vector<1x256x4xbf16>
    %70 = vector.shape_cast %69 : vector<1x256x4xbf16> to vector<256x4xbf16>
    %71 = tpu.concatenate %54, %56, %58, %60, %62, %64, %66, %68, %70 in 1 : vector<256x4xbf16>, vector<256x4xbf16>, vector<256x4xbf16>, vector<256x4xbf16>, vector<256x4xbf16>, vector<256x4xbf16>, vector<256x4xbf16>, vector<256x4xbf16>, vector<256x4xbf16> -> vector<256x36xbf16>
    %c0_55 = arith.constant 0 : index
    %c0_56 = arith.constant 0 : index
    %72 = vector.load %arg4[%c0_55, %c0_56] : memref<36x4xbf16, #tpu.memory_space<vmem>>, vector<36x4xbf16>
    %cst_57 = arith.constant dense<0.000000e+00> : vector<256x4xf32>
    %73 = tpu.matmul %71, %72, %cst_57 {dimension_numbers = #tpu.dot_dimension_numbers<[1], [0], [0], [1], [0, 0, 1, 1], [], []>} : vector<256x36xbf16>, vector<36x4xbf16>, vector<256x4xf32> -> vector<256x4xf32>
    %c0_58 = arith.constant 0 : index
    %c0_59 = arith.constant 0 : index
    %74 = vector.load %arg5[%c0_58, %c0_59] : memref<1x4xf32, #tpu.memory_space<vmem>>, vector<1x4xf32>
    %75 = vector.broadcast %74 : vector<1x4xf32> to vector<256x4xf32>
    %76 = arith.addf %73, %75 : vector<256x4xf32>
    %cst_60 = arith.constant 0.000000e+00 : f32
    %77 = vector.broadcast %cst_60 : f32 to vector<256x4xf32>
    %78 = arith.maximumf %76, %77 : vector<256x4xf32>
    %79 = arith.truncf %78 : vector<256x4xf32> to vector<256x4xbf16>
    %c0_61 = arith.constant 0 : index
    %c0_62 = arith.constant 0 : index
    %80 = vector.load %arg6[%c0_61, %c0_62] : memref<4x16xbf16, #tpu.memory_space<vmem>>, vector<4x16xbf16>
    %cst_63 = arith.constant dense<0.000000e+00> : vector<256x16xf32>
    %81 = tpu.matmul %79, %80, %cst_63 {dimension_numbers = #tpu.dot_dimension_numbers<[1], [0], [0], [1], [0, 0, 1, 1], [], []>} : vector<256x4xbf16>, vector<4x16xbf16>, vector<256x16xf32> -> vector<256x16xf32>
    %c0_64 = arith.constant 0 : index
    %c0_65 = arith.constant 0 : index
    %82 = vector.load %arg7[%c0_64, %c0_65] : memref<1x16xf32, #tpu.memory_space<vmem>>, vector<1x16xf32>
    %83 = vector.broadcast %82 : vector<1x16xf32> to vector<256x16xf32>
    %84 = arith.addf %81, %83 : vector<256x16xf32>
    %85 = arith.extf %1 : vector<256x16xbf16> to vector<256x16xf32>
    %86 = arith.addf %84, %85 : vector<256x16xf32>
    %cst_66 = arith.constant 0.000000e+00 : f32
    %87 = vector.broadcast %cst_66 : f32 to vector<256x16xf32>
    %88 = arith.maximumf %86, %87 : vector<256x16xf32>
    %89 = arith.truncf %88 : vector<256x16xf32> to vector<256x16xbf16>
    %c0_67 = arith.constant 0 : index
    %c0_68 = arith.constant 0 : index
    %c0_69 = arith.constant 0 : index
    %90 = vector.load %arg8[%c0_67, %c0_68, %c0_69] : memref<1x256x16xbf16, #tpu.memory_space<vmem>>, vector<1x256x16xbf16>
    %91 = vector.shape_cast %90 : vector<1x256x16xbf16> to vector<256x16xbf16>
    %92 = vector.shape_cast %89 : vector<256x16xbf16> to vector<1x256x16xbf16>
    tpu.vector_store %arg8[%c0_67, %c0_68, %c0_69], %92 {strides = array<i32>} : memref<1x256x16xbf16, #tpu.memory_space<vmem>>, vector<1x256x16xbf16>,
    return
  }
  func.func @transform_0(%arg0: i32) -> (i32, i32, i32) {
    %c0_i32 = arith.constant 0 : i32
    %c0_i32_0 = arith.constant 0 : i32
    %c0_i32_1 = arith.constant 0 : i32
    return %arg0, %c0_i32, %c0_i32_0 : i32, i32, i32
  }
  func.func @transform_1(%arg0: i32) -> (i32, i32) {
    %c0_i32 = arith.constant 0 : i32
    %c0_i32_0 = arith.constant 0 : i32
    %c0_i32_1 = arith.constant 0 : i32
    return %c0_i32, %c0_i32_0 : i32, i32
  }
  func.func @transform_2(%arg0: i32) -> (i32, i32) {
    %c0_i32 = arith.constant 0 : i32
    %c0_i32_0 = arith.constant 0 : i32
    %c0_i32_1 = arith.constant 0 : i32
    return %c0_i32, %c0_i32_0 : i32, i32
  }
  func.func @transform_3(%arg0: i32) -> (i32, i32) {
    %c0_i32 = arith.constant 0 : i32
    %c0_i32_0 = arith.constant 0 : i32
    %c0_i32_1 = arith.constant 0 : i32
    return %c0_i32, %c0_i32_0 : i32, i32
  }
  func.func @transform_4(%arg0: i32) -> (i32, i32) {
    %c0_i32 = arith.constant 0 : i32
    %c0_i32_0 = arith.constant 0 : i32
    %c0_i32_1 = arith.constant 0 : i32
    return %c0_i32, %c0_i32_0 : i32, i32
  }
  func.func @transform_5(%arg0: i32) -> (i32, i32) {
    %c0_i32 = arith.constant 0 : i32
    %c0_i32_0 = arith.constant 0 : i32
    %c0_i32_1 = arith.constant 0 : i32
    return %c0_i32, %c0_i32_0 : i32, i32
  }
  func.func @transform_6(%arg0: i32) -> (i32, i32) {
    %c0_i32 = arith.constant 0 : i32
    %c0_i32_0 = arith.constant 0 : i32
    %c0_i32_1 = arith.constant 0 : i32
    return %c0_i32, %c0_i32_0 : i32, i32
  }
  func.func @transform_7(%arg0: i32) -> (i32, i32, i32) {
    %c0_i32 = arith.constant 0 : i32
    %c0_i32_0 = arith.constant 0 : i32
    %c0_i32_1 = arith.constant 0 : i32
    return %arg0, %c0_i32, %c0_i32_0 : i32, i32, i32
  }
}

</mosaic_0001>

<llo_original>
// kernel: tpu_custom_call.1
$region0: #{tpu_custom_call.1}
  #allocation0 [shape = 'u32[]', space=smem, size = 0x4, offset = 0x4, fixed_abs, tag = 'smem constant byte address 0x4 - core index']
  #allocation1 [shape = 'u32[144,128]{1,0:T(1,128)}', space=vmem, size = 0x12000, scoped, tag = 'internal scratch']
  #allocation2 [shape = 'bf16[3,288,4]{2,1,0:T(16,128)(2,1)}', space=vmem, size = 0x36000, scoped, tag = 'scratch operand']
  %s0 = inlined_call_operand.vmem [shape: bf16[2,256,16], index: 0, kind: input, shape index: {}]
  %s1 = inlined_call_operand.vmem [shape: bf16[16,4], index: 1, kind: input, shape index: {}]
  %s2 = inlined_call_operand.vmem [shape: f32[1,4], index: 2, kind: input, shape index: {}]
  %s3 = inlined_call_operand.vmem [shape: bf16[36,4], index: 3, kind: input, shape index: {}]
  %s4 = inlined_call_operand.vmem [shape: f32[1,4], index: 4, kind: input, shape index: {}]
  %s5 = inlined_call_operand.vmem [shape: bf16[4,16], index: 5, kind: input, shape index: {}]
  %s6 = inlined_call_operand.vmem [shape: f32[1,16], index: 6, kind: input, shape index: {}]
  %s7 = inlined_call_operand.vmem [shape: bf16[2,256,16], index: 7, kind: output, shape index: {}]
  %s8 = sld [smem:[#allocation0]]
  $region61: #{tpu_custom_call.1} parent=0
    _
  %s10 = ssub.s32 1, %s8
  %s11 = scalar_select 0, %s10, %s8
  loop: start=0, step=1, limit=4
  $region2: #{tpu_custom_call.1} parent=0 // loop_pre_header
    _
  $region3: #{tpu_custom_call.1} parent=0 // loop_header
    %s13 = sphi 0, %s17
    %p14 = scmp.ge.s32.totalorder %s13, 4
    %s23 = sphi 0, %s25
    %s26 = sphi 0, %s23
    %s27 = sphi 0, %s26
    %s43 = sphi 0, %s27
    %s47 = sphi 0, %s47
    %s49 = sphi 0, %s47
    %s50 = sphi 0, %s49
    %s64 = sphi 0, %s50
    %s68 = sphi 0, %s68
    %s70 = sphi 0, %s68
    %s71 = sphi 0, %s70
    %s85 = sphi 0, %s71
    %s89 = sphi 0, %s89
    %s91 = sphi 0, %s89
    %s92 = sphi 0, %s91
    %s106 = sphi 0, %s92
    %s110 = sphi 0, %s110
    %s112 = sphi 0, %s110
    %s113 = sphi 0, %s112
    %s127 = sphi 0, %s113
    %s131 = sphi 0, %s131
    %s133 = sphi 0, %s131
    %s134 = sphi 0, %s133
    %s148 = sphi 0, %s134
    %s152 = sphi 0, %s152
    %s154 = sphi 0, %s152
    %s155 = sphi 0, %s154
    %s169 = sphi 0, %s155
    %s175 = sphi 0, %s177
    %s178 = sphi 0, %s175
    %s179 = sphi 0, %s178
    %s195 = sphi 0, %s179
  $region4: #{tpu_custom_call.1} parent=0 // loop_header_branch
    %16 = sbr.rel (%p14) target = $region8
  $region5: #{tpu_custom_call.1} parent=0 // loop_body
    %s18 = ssub.s32 %s13, 1
    %s19 = ssub.s32 %s13, 2
    %s20 = sadd.s32 %s13, 1
    %s21 = ssub.s32 %s13, %s20
    %p22 = scmp.eq.s32.totalorder %s21, 0
    %s24 = sadd.s32 %s23, 1
    %s25 = scalar_select %p22, %s23, %s24
    %p28 = pneg %p22
    %p29 = scmp.eq.s32.totalorder %s13, 1
    %p30 = por %p28, %p29
    %p31 = scmp.ne.s32.totalorder %s23, %s26
    %p32 = scmp.eq.s32.totalorder %s13, 0
    %p33 = por %p31, %p32
    %p34 = scmp.ne.s32.totalorder %s23, %s26
    %p35 = scmp.eq.s32.totalorder %s18, 1
    %p36 = por %p34, %p35
    %p37 = scmp.ne.s32.totalorder %s26, %s27
    %p38 = scmp.eq.s32.totalorder %s18, 0
    %p39 = por %p37, %p38
    %p40 = scmp.ne.s32.totalorder %s26, %s27
    %p41 = scmp.eq.s32.totalorder %s19, 1
    %p42 = por %p40, %p41
    %p44 = scmp.ne.s32.totalorder %s27, %s43
    %p45 = scmp.eq.s32.totalorder %s19, 0
    %p46 = por %p44, %p45
    %s48 = sadd.s32 %s47, 1
    %p51 = scmp.eq.s32.totalorder %s13, 1
    %p52 = scmp.ne.s32.totalorder %s47, %s49
    %p53 = scmp.eq.s32.totalorder %s13, 0
    %p54 = por %p52, %p53
    %p55 = scmp.ne.s32.totalorder %s47, %s49
    %p56 = scmp.eq.s32.totalorder %s18, 1
    %p57 = por %p55, %p56
    %p58 = scmp.ne.s32.totalorder %s49, %s50
    %p59 = scmp.eq.s32.totalorder %s18, 0
    %p60 = por %p58, %p59
    %p61 = scmp.ne.s32.totalorder %s49, %s50
    %p62 = scmp.eq.s32.totalorder %s19, 1
    %p63 = por %p61, %p62
    %p65 = scmp.ne.s32.totalorder %s50, %s64
    %p66 = scmp.eq.s32.totalorder %s19, 0
    %p67 = por %p65, %p66
    %s69 = sadd.s32 %s68, 1
    %p72 = scmp.eq.s32.totalorder %s13, 1
    %p73 = scmp.ne.s32.totalorder %s68, %s70
    %p74 = scmp.eq.s32.totalorder %s13, 0
    %p75 = por %p73, %p74
    %p76 = scmp.ne.s32.totalorder %s68, %s70
    %p77 = scmp.eq.s32.totalorder %s18, 1
    %p78 = por %p76, %p77
    %p79 = scmp.ne.s32.totalorder %s70, %s71
    %p80 = scmp.eq.s32.totalorder %s18, 0
    %p81 = por %p79, %p80
    %p82 = scmp.ne.s32.totalorder %s70, %s71
    %p83 = scmp.eq.s32.totalorder %s19, 1
    %p84 = por %p82, %p83
    %p86 = scmp.ne.s32.totalorder %s71, %s85
    %p87 = scmp.eq.s32.totalorder %s19, 0
    %p88 = por %p86, %p87
    %s90 = sadd.s32 %s89, 1
    %p93 = scmp.eq.s32.totalorder %s13, 1
    %p94 = scmp.ne.s32.totalorder %s89, %s91
    %p95 = scmp.eq.s32.totalorder %s13, 0
    %p96 = por %p94, %p95
    %p97 = scmp.ne.s32.totalorder %s89, %s91
    %p98 = scmp.eq.s32.totalorder %s18, 1
    %p99 = por %p97, %p98
    %p100 = scmp.ne.s32.totalorder %s91, %s92
    %p101 = scmp.eq.s32.totalorder %s18, 0
    %p102 = por %p100, %p101
    %p103 = scmp.ne.s32.totalorder %s91, %s92
    %p104 = scmp.eq.s32.totalorder %s19, 1
    %p105 = por %p103, %p104
    %p107 = scmp.ne.s32.totalorder %s92, %s106
    %p108 = scmp.eq.s32.totalorder %s19, 0
    %p109 = por %p107, %p108
    %s111 = sadd.s32 %s110, 1
    %p114 = scmp.eq.s32.totalorder %s13, 1
    %p115 = scmp.ne.s32.totalorder %s110, %s112
    %p116 = scmp.eq.s32.totalorder %s13, 0
    %p117 = por %p115, %p116
    %p118 = scmp.ne.s32.totalorder %s110, %s112
    %p119 = scmp.eq.s32.totalorder %s18, 1
    %p120 = por %p118, %p119
    %p121 = scmp.ne.s32.totalorder %s112, %s113
    %p122 = scmp.eq.s32.totalorder %s18, 0
    %p123 = por %p121, %p122
    %p124 = scmp.ne.s32.totalorder %s112, %s113
    %p125 = scmp.eq.s32.totalorder %s19, 1
    %p126 = por %p124, %p125
    %p128 = scmp.ne.s32.totalorder %s113, %s127
    %p129 = scmp.eq.s32.totalorder %s19, 0
    %p130 = por %p128, %p129
    %s132 = sadd.s32 %s131, 1
    %p135 = scmp.eq.s32.totalorder %s13, 1
    %p136 = scmp.ne.s32.totalorder %s131, %s133
    %p137 = scmp.eq.s32.totalorder %s13, 0
    %p138 = por %p136, %p137
    %p139 = scmp.ne.s32.totalorder %s131, %s133
    %p140 = scmp.eq.s32.totalorder %s18, 1
    %p141 = por %p139, %p140
    %p142 = scmp.ne.s32.totalorder %s133, %s134
    %p143 = scmp.eq.s32.totalorder %s18, 0
    %p144 = por %p142, %p143
    %p145 = scmp.ne.s32.totalorder %s133, %s134
    %p146 = scmp.eq.s32.totalorder %s19, 1
    %p147 = por %p145, %p146
    %p149 = scmp.ne.s32.totalorder %s134, %s148
    %p150 = scmp.eq.s32.totalorder %s19, 0
    %p151 = por %p149, %p150
    %s153 = sadd.s32 %s152, 1
    %p156 = scmp.eq.s32.totalorder %s13, 1
    %p157 = scmp.ne.s32.totalorder %s152, %s154
    %p158 = scmp.eq.s32.totalorder %s13, 0
    %p159 = por %p157, %p158
    %p160 = scmp.ne.s32.totalorder %s152, %s154
    %p161 = scmp.eq.s32.totalorder %s18, 1
    %p162 = por %p160, %p161
    %p163 = scmp.ne.s32.totalorder %s154, %s155
    %p164 = scmp.eq.s32.totalorder %s18, 0
    %p165 = por %p163, %p164
    %p166 = scmp.ne.s32.totalorder %s154, %s155
    %p167 = scmp.eq.s32.totalorder %s19, 1
    %p168 = por %p166, %p167
    %p170 = scmp.ne.s32.totalorder %s155, %s169
    %p171 = scmp.eq.s32.totalorder %s19, 0
    %p172 = por %p170, %p171
    %s173 = ssub.s32 %s13, %s20
    %p174 = scmp.eq.s32.totalorder %s173, 0
    %s176 = sadd.s32 %s175, 1
    %s177 = scalar_select %p174, %s175, %s176
    %p180 = pneg %p174
    %p181 = scmp.eq.s32.totalorder %s13, 1
    %p182 = por %p180, %p181
    %p183 = scmp.ne.s32.totalorder %s175, %s178
    %p184 = scmp.eq.s32.totalorder %s13, 0
    %p185 = por %p183, %p184
    %p186 = scmp.ne.s32.totalorder %s175, %s178
    %p187 = scmp.eq.s32.totalorder %s18, 1
    %p188 = por %p186, %p187
    %p189 = scmp.ne.s32.totalorder %s178, %s179
    %p190 = scmp.eq.s32.totalorder %s18, 0
    %p191 = por %p189, %p190
    %p192 = scmp.ne.s32.totalorder %s178, %s179
    %p193 = scmp.eq.s32.totalorder %s19, 1
    %p194 = por %p192, %p193
    %p196 = scmp.ne.s32.totalorder %s179, %s195
    %p197 = scmp.eq.s32.totalorder %s19, 0
    %p198 = por %p196, %p197
    %p199 = scmp.le.s32.totalorder 1, %s13
    %p200 = scmp.lt.s32.totalorder %s13, 3
    %p201 = pnand %p199, %p200
    %p202 = pneg %p201
    // Predicated region
    $region9: #{tpu_custom_call.1} parent=5 // pred_check
      _
    $region10: #{tpu_custom_call.1} parent=5 // pred_check_branch
      %204 = sbr.rel (%p201) target = $region12
    $region11: #{tpu_custom_call.1} parent=5 // pred_region
      %s205 = ssub.s32 %s13, 1
      // Predicated region
      $region13: #{tpu_custom_call.1} parent=11 // pred_check
        %p206 = pneg %p60
      $region14: #{tpu_custom_call.1} parent=11 // pred_check_branch
        %208 = sbr.rel (%p206) target = $region16
      $region15: #{tpu_custom_call.1} parent=11 // pred_region
        _
      $region16: #{tpu_custom_call.1} parent=11 // pred_fallthru
        _
      // Predicated region
      $region17: #{tpu_custom_call.1} parent=11 // pred_check
        %p209 = pneg %p81
      $region18: #{tpu_custom_call.1} parent=11 // pred_check_branch
        %211 = sbr.rel (%p209) target = $region20
      $region19: #{tpu_custom_call.1} parent=11 // pred_region
        _
      $region20: #{tpu_custom_call.1} parent=11 // pred_fallthru
        _
      // Predicated region
      $region21: #{tpu_custom_call.1} parent=11 // pred_check
        %p212 = pneg %p102
      $region22: #{tpu_custom_call.1} parent=11 // pred_check_branch
        %214 = sbr.rel (%p212) target = $region24
      $region23: #{tpu_custom_call.1} parent=11 // pred_region
        _
      $region24: #{tpu_custom_call.1} parent=11 // pred_fallthru
        _
      // Predicated region
      $region25: #{tpu_custom_call.1} parent=11 // pred_check
        %p215 = pneg %p123
      $region26: #{tpu_custom_call.1} parent=11 // pred_check_branch
        %217 = sbr.rel (%p215) target = $region28
      $region27: #{tpu_custom_call.1} parent=11 // pred_region
        _
      $region28: #{tpu_custom_call.1} parent=11 // pred_fallthru
        _
      // Predicated region
      $region29: #{tpu_custom_call.1} parent=11 // pred_check
        %p218 = pneg %p144
      $region30: #{tpu_custom_call.1} parent=11 // pred_check_branch
        %220 = sbr.rel (%p218) target = $region32
      $region31: #{tpu_custom_call.1} parent=11 // pred_region
        _
      $region32: #{tpu_custom_call.1} parent=11 // pred_fallthru
        _
      // Predicated region
      $region33: #{tpu_custom_call.1} parent=11 // pred_check
        %p221 = pneg %p165
      $region34: #{tpu_custom_call.1} parent=11 // pred_check_branch
        %223 = sbr.rel (%p221) target = $region36
      $region35: #{tpu_custom_call.1} parent=11 // pred_region
        _
      $region36: #{tpu_custom_call.1} parent=11 // pred_fallthru
        _
    $region12: #{tpu_custom_call.1} parent=5 // pred_fallthru
      _
    %p224 = scmp.lt.s32.totalorder %s13, 2
    // Predicated region
    $region37: #{tpu_custom_call.1} parent=5 // pred_check
      %p225 = pneg %p224
    $region38: #{tpu_custom_call.1} parent=5 // pred_check_branch
      %227 = sbr.rel (%p225) target = $region40
    $region39: #{tpu_custom_call.1} parent=5 // pred_region
      // Predicated region
      $region41: #{tpu_custom_call.1} parent=39 // pred_check
        %p228 = pneg %p33
      $region42: #{tpu_custom_call.1} parent=39 // pred_check_branch
        %230 = sbr.rel (%p228) target = $region44
      $region43: #{tpu_custom_call.1} parent=39 // pred_region
        %p231 = scmp.lt.s32.totalorder %s13, 1
        %s232 = scalar_select %p231, %s13, 1
        %s233 = smul.addr %s232, 32
        %s234 = smul.addr %s233, 4
        %s235 = scalar_lea.vmem %s0, %s234
      $region44: #{tpu_custom_call.1} parent=39 // pred_fallthru
        _
    $region40: #{tpu_custom_call.1} parent=5 // pred_fallthru
      _
    %p236 = scmp.le.s32.totalorder 1, %s13
    %p237 = scmp.lt.s32.totalorder %s13, 3
    %p238 = pnand %p236, %p237
    %p239 = pneg %p238
    // Predicated region
    $region45: #{tpu_custom_call.1} parent=5 // pred_check
      _
    $region46: #{tpu_custom_call.1} parent=5 // pred_check_branch
      %241 = sbr.rel (%p238) target = $region48
    $region47: #{tpu_custom_call.1} parent=5 // pred_region
      %s242 = ssub.s32 %s13, 1
      %p243 = scmp.lt.s32.totalorder %s18, 1
      %s244 = scalar_select %p243, %s18, 1
      %s245 = smul.addr %s244, 32
      %s246 = smul.addr %s245, 4
      %s247 = scalar_lea.vmem %s0, %s246
      %p248 = pneg %p39
      %p249 = pneg %p36
      %p250 = pneg %p60
      %p251 = pneg %p57
      %p252 = pneg %p81
      %p253 = pneg %p78
      %p254 = pneg %p102
      %p255 = pneg %p99
      %p256 = pneg %p123
      %p257 = pneg %p120
      %p258 = pneg %p144
      %p259 = pneg %p141
      %p260 = pneg %p165
      %p261 = pneg %p162
      %p262 = pneg %p191
      %p263 = pneg %p188
      %p264 = scmp.lt.s32.totalorder %s18, 1
      %s265 = scalar_select %p264, %s18, 1
      %s266 = smul.addr %s265, 32
      %s267 = smul.addr %s266, 4
      %s268 = scalar_lea.vmem %s7, %s267
      %p269 = scmp.lt.s32.totalorder %s18, 1
      %s270 = scalar_select %p269, %s18, 1
      %s271 = smul.addr %s270, 32
      %s272 = smul.addr %s271, 4
      %s273 = scalar_lea.vmem %s0, %s272
      %p274 = scmp.lt.s32.totalorder %s18, 1
      %s275 = scalar_select %p274, %s18, 1
      %s276 = smul.addr %s275, 32
      %s277 = smul.addr %s276, 4
      %s278 = scalar_lea.vmem %s7, %s277
      %v280 = vld [vmem:[%s273] sm:$0xf]
      %v281 = vld [vmem:[%s273 + $0x4] sm:$0xf]
      %v282 = vld [vmem:[%s273 + $0x8] sm:$0xf]
      %v283 = vld [vmem:[%s273 + $0xc] sm:$0xf]
      %v284 = vld [vmem:[%s273 + $0x10] sm:$0xf]
      %v285 = vld [vmem:[%s273 + $0x14] sm:$0xf]
      %v286 = vld [vmem:[%s273 + $0x18] sm:$0xf]
      %v287 = vld [vmem:[%s273 + $0x1c] sm:$0xf]
      %v288 = vld [vmem:[%s273 + $0x20] sm:$0xf]
      %v289 = vld [vmem:[%s273 + $0x24] sm:$0xf]
      %v290 = vld [vmem:[%s273 + $0x28] sm:$0xf]
      %v291 = vld [vmem:[%s273 + $0x2c] sm:$0xf]
      %v292 = vld [vmem:[%s273 + $0x30] sm:$0xf]
      %v293 = vld [vmem:[%s273 + $0x34] sm:$0xf]
      %v294 = vld [vmem:[%s273 + $0x38] sm:$0xf]
      %v295 = vld [vmem:[%s273 + $0x3c] sm:$0xf]
      %v296 = vld [vmem:[%s273 + $0x40] sm:$0xf]
      %v297 = vld [vmem:[%s273 + $0x44] sm:$0xf]
      %v298 = vld [vmem:[%s273 + $0x48] sm:$0xf]
      %v299 = vld [vmem:[%s273 + $0x4c] sm:$0xf]
      %v300 = vld [vmem:[%s273 + $0x50] sm:$0xf]
      %v301 = vld [vmem:[%s273 + $0x54] sm:$0xf]
      %v302 = vld [vmem:[%s273 + $0x58] sm:$0xf]
      %v303 = vld [vmem:[%s273 + $0x5c] sm:$0xf]
      %v304 = vld [vmem:[%s273 + $0x60] sm:$0xf]
      %v305 = vld [vmem:[%s273 + $0x64] sm:$0xf]
      %v306 = vld [vmem:[%s273 + $0x68] sm:$0xf]
      %v307 = vld [vmem:[%s273 + $0x6c] sm:$0xf]
      %v308 = vld [vmem:[%s273 + $0x70] sm:$0xf]
      %v309 = vld [vmem:[%s273 + $0x74] sm:$0xf]
      %v310 = vld [vmem:[%s273 + $0x78] sm:$0xf]
      %v311 = vld [vmem:[%s273 + $0x7c] sm:$0xf]
      %v312 = vld [vmem:[%s1] sm:$0xf]
      %v313 = vld [vmem:[%s1 + $0x4] sm:$0xf]
      %v314 = vld [vmem:[%s2] sm:$0x1]
      %v316 = vlaneseq
      %v317 = vshrl.u32 %v316, 7
      %v318 = vsub.s32 0, %v317
      %v319 = vrot.slane %v314, %v318
      %v353 = vunpack.c.l.b16 %v280
      %v354 = vunpack.c.l.b16 %v281
      %v355 = vunpack.c.l.b16 %v282
      %v356 = vunpack.c.l.b16 %v283
      %v357 = vunpack.c.l.b16 %v284
      %v358 = vunpack.c.l.b16 %v285
      %v359 = vunpack.c.l.b16 %v286
      %v360 = vunpack.c.l.b16 %v287
      %v361 = vunpack.c.l.b16 %v288
      %v362 = vunpack.c.l.b16 %v289
      %v363 = vunpack.c.l.b16 %v290
      %v364 = vunpack.c.l.b16 %v291
      %v365 = vunpack.c.l.b16 %v292
      %v366 = vunpack.c.l.b16 %v293
      %v367 = vunpack.c.l.b16 %v294
      %v368 = vunpack.c.l.b16 %v295
      %v369 = vunpack.c.l.b16 %v296
      %v370 = vunpack.c.l.b16 %v297
      %v371 = vunpack.c.l.b16 %v298
      %v372 = vunpack.c.l.b16 %v299
      %v373 = vunpack.c.l.b16 %v300
      %v374 = vunpack.c.l.b16 %v301
      %v375 = vunpack.c.l.b16 %v302
      %v376 = vunpack.c.l.b16 %v303
      %v377 = vunpack.c.l.b16 %v304
      %v378 = vunpack.c.l.b16 %v305
      %v379 = vunpack.c.l.b16 %v306
      %v380 = vunpack.c.l.b16 %v307
      %v381 = vunpack.c.l.b16 %v308
      %v382 = vunpack.c.l.b16 %v309
      %v383 = vunpack.c.l.b16 %v310
      %v384 = vunpack.c.l.b16 %v311
      %v385 = vpack.c.b16 %v354, %v353
      %v386 = vpack.c.b16 %v356, %v355
      %v387 = vpack.c.b16 %v358, %v357
      %v388 = vpack.c.b16 %v360, %v359
      %v389 = vpack.c.b16 %v362, %v361
      %v390 = vpack.c.b16 %v364, %v363
      %v391 = vpack.c.b16 %v366, %v365
      %v392 = vpack.c.b16 %v368, %v367
      %v393 = vpack.c.b16 %v370, %v369
      %v394 = vpack.c.b16 %v372, %v371
      %v395 = vpack.c.b16 %v374, %v373
      %v396 = vpack.c.b16 %v376, %v375
      %v397 = vpack.c.b16 %v378, %v377
      %v398 = vpack.c.b16 %v380, %v379
      %v399 = vpack.c.b16 %v382, %v381
      %v400 = vpack.c.b16 %v384, %v383
      %v403 = vunpack.c.l.b16 %v312
      %v404 = vunpack.c.l.b16 %v313
      %v405 = vpack.c.b16 %v404, %v403
      %vm407 = vcmask 130048
      %v409 = vsel %vm407, %v385, 0
      %v412 = vsel %vm407, %v386, 0
      %v415 = vsel %vm407, %v387, 0
      %v418 = vsel %vm407, %v388, 0
      %v421 = vsel %vm407, %v389, 0
      %v424 = vsel %vm407, %v390, 0
      %v427 = vsel %vm407, %v391, 0
      %v430 = vsel %vm407, %v392, 0
      %v433 = vsel %vm407, %v393, 0
      %v436 = vsel %vm407, %v394, 0
      %v439 = vsel %vm407, %v395, 0
      %v442 = vsel %vm407, %v396, 0
      %v445 = vsel %vm407, %v397, 0
      %v448 = vsel %vm407, %v398, 0
      %v451 = vsel %vm407, %v399, 0
      %v454 = vsel %vm407, %v400, 0
      %456 = vmatprep.subr.bf16.mxu0 0
      %457 = vmatpush1.bf16.msra.mxu0 %v405
      %458 = vmatprep.subr.bf16.mxu0 0
      %459 = vmatpush1.bf16.msra.mxu0 0
      %460 = vmatprep.subr.bf16.mxu0 0
      %461 = vmatpush1.bf16.msra.mxu0 0
      %462 = vmatprep.subr.bf16.mxu0 0
      %463 = vmatpush1.bf16.msra.mxu0 0
      %464 = vmatprep.subr.bf16.mxu0 0
      %465 = vmatpush1.bf16.msra.mxu0 0
      %466 = vmatprep.subr.bf16.mxu0 0
      %467 = vmatpush1.bf16.msra.mxu0 0
      %468 = vmatprep.subr.bf16.mxu0 0
      %469 = vmatpush1.bf16.msra.mxu0 0
      %470 = vmatprep.subr.bf16.mxu0 0
      %471 = vmatpush1.bf16.msra.mxu0 0
      %472 = vmatprep.subr.bf16.mxu0 0
      %473 = vmatpush1.bf16.msra.mxu0 0
      %474 = vmatprep.subr.bf16.mxu0 0
      %475 = vmatpush1.bf16.msra.mxu0 0
      %476 = vmatprep.subr.bf16.mxu0 0
      %477 = vmatpush1.bf16.msra.mxu0 0
      %478 = vmatprep.subr.bf16.mxu0 0
      %479 = vmatpush1.bf16.msra.mxu0 0
      %480 = vmatprep.subr.bf16.mxu0 0
      %481 = vmatpush1.bf16.msra.mxu0 0
      %482 = vmatprep.subr.bf16.mxu0 0
      %483 = vmatpush1.bf16.msra.mxu0 0
      %484 = vmatprep.subr.bf16.mxu0 0
      %485 = vmatpush1.bf16.msra.mxu0 0
      %486 = vmatprep.subr.bf16.mxu0 0
      %487 = vmatpush1.bf16.msra.mxu0 0
      %488 = vmatprep.mubr.bf16.mxu0 0
      %489 = vmatmul.mubr.bf16.gmra.mrb[0].mxu0 %v409
      %v490 = vpop.f32.mrb[0].mxu0
      %v491 = vadd.f32 %v319, %v490
      %v492 = vpop.f32.mrb[0].mxu0
      %v493 = vpop.f32.mrb[0].mxu0
      %v494 = vadd.f32 %v319, %v493
      %v495 = vpop.f32.mrb[0].mxu0
      %496 = vmatprep.mubr.bf16.mxu0 0
      %497 = vmatmul.mubr.bf16.gmra.mrb[0].mxu0 %v412
      %v498 = vpop.f32.mrb[0].mxu0
      %v499 = vadd.f32 %v319, %v498
      %v500 = vpop.f32.mrb[0].mxu0
      %v501 = vpop.f32.mrb[0].mxu0
      %v502 = vadd.f32 %v319, %v501
      %v503 = vpop.f32.mrb[0].mxu0
      %504 = vmatprep.mubr.bf16.mxu0 0
      %505 = vmatmul.mubr.bf16.gmra.mrb[0].mxu0 %v415
      %v506 = vpop.f32.mrb[0].mxu0
      %v507 = vadd.f32 %v319, %v506
      %v508 = vpop.f32.mrb[0].mxu0
      %v509 = vpop.f32.mrb[0].mxu0
      %v510 = vadd.f32 %v319, %v509
      %v511 = vpop.f32.mrb[0].mxu0
      %512 = vmatprep.mubr.bf16.mxu0 0
      %513 = vmatmul.mubr.bf16.gmra.mrb[0].mxu0 %v418
      %v514 = vpop.f32.mrb[0].mxu0
      %v515 = vadd.f32 %v319, %v514
      %v516 = vpop.f32.mrb[0].mxu0
      %v517 = vpop.f32.mrb[0].mxu0
      %v518 = vadd.f32 %v319, %v517
      %v519 = vpop.f32.mrb[0].mxu0
      %520 = vmatprep.mubr.bf16.mxu0 0
      %521 = vmatmul.mubr.bf16.gmra.mrb[0].mxu0 %v421
      %v522 = vpop.f32.mrb[0].mxu0
      %v523 = vadd.f32 %v319, %v522
      %v524 = vpop.f32.mrb[0].mxu0
      %v525 = vpop.f32.mrb[0].mxu0
      %v526 = vadd.f32 %v319, %v525
      %v527 = vpop.f32.mrb[0].mxu0
      %528 = vmatprep.mubr.bf16.mxu0 0
      %529 = vmatmul.mubr.bf16.gmra.mrb[0].mxu0 %v424
      %v530 = vpop.f32.mrb[0].mxu0
      %v531 = vadd.f32 %v319, %v530
      %v532 = vpop.f32.mrb[0].mxu0
      %v533 = vpop.f32.mrb[0].mxu0
      %v534 = vadd.f32 %v319, %v533
      %v535 = vpop.f32.mrb[0].mxu0
      %536 = vmatprep.mubr.bf16.mxu0 0
      %537 = vmatmul.mubr.bf16.gmra.mrb[0].mxu0 %v427
      %v538 = vpop.f32.mrb[0].mxu0
      %v539 = vadd.f32 %v319, %v538
      %v540 = vpop.f32.mrb[0].mxu0
      %v541 = vpop.f32.mrb[0].mxu0
      %v542 = vadd.f32 %v319, %v541
      %v543 = vpop.f32.mrb[0].mxu0
      %544 = vmatprep.mubr.bf16.mxu0 0
      %545 = vmatmul.mubr.bf16.gmra.mrb[0].mxu0 %v430
      %v546 = vpop.f32.mrb[0].mxu0
      %v547 = vadd.f32 %v319, %v546
      %v548 = vpop.f32.mrb[0].mxu0
      %v549 = vpop.f32.mrb[0].mxu0
      %v550 = vadd.f32 %v319, %v549
      %v551 = vpop.f32.mrb[0].mxu0
      %552 = vmatprep.mubr.bf16.mxu0 0
      %553 = vmatmul.mubr.bf16.gmra.mrb[0].mxu0 %v433
      %v554 = vpop.f32.mrb[0].mxu0
      %v555 = vadd.f32 %v319, %v554
      %v556 = vpop.f32.mrb[0].mxu0
      %v557 = vpop.f32.mrb[0].mxu0
      %v558 = vadd.f32 %v319, %v557
      %v559 = vpop.f32.mrb[0].mxu0
      %560 = vmatprep.mubr.bf16.mxu0 0
      %561 = vmatmul.mubr.bf16.gmra.mrb[0].mxu0 %v436
      %v562 = vpop.f32.mrb[0].mxu0
      %v563 = vadd.f32 %v319, %v562
      %v564 = vpop.f32.mrb[0].mxu0
      %v565 = vpop.f32.mrb[0].mxu0
      %v566 = vadd.f32 %v319, %v565
      %v567 = vpop.f32.mrb[0].mxu0
      %568 = vmatprep.mubr.bf16.mxu0 0
      %569 = vmatmul.mubr.bf16.gmra.mrb[0].mxu0 %v439
      %v570 = vpop.f32.mrb[0].mxu0
      %v571 = vadd.f32 %v319, %v570
      %v572 = vpop.f32.mrb[0].mxu0
      %v573 = vpop.f32.mrb[0].mxu0
      %v574 = vadd.f32 %v319, %v573
      %v575 = vpop.f32.mrb[0].mxu0
      %576 = vmatprep.mubr.bf16.mxu0 0
      %577 = vmatmul.mubr.bf16.gmra.mrb[0].mxu0 %v442
      %v578 = vpop.f32.mrb[0].mxu0
      %v579 = vadd.f32 %v319, %v578
      %v580 = vpop.f32.mrb[0].mxu0
      %v581 = vpop.f32.mrb[0].mxu0
      %v582 = vadd.f32 %v319, %v581
      %v583 = vpop.f32.mrb[0].mxu0
      %584 = vmatprep.mubr.bf16.mxu0 0
      %585 = vmatmul.mubr.bf16.gmra.mrb[0].mxu0 %v445
      %v586 = vpop.f32.mrb[0].mxu0
      %v587 = vadd.f32 %v319, %v586
      %v588 = vpop.f32.mrb[0].mxu0
      %v589 = vpop.f32.mrb[0].mxu0
      %v590 = vadd.f32 %v319, %v589
      %v591 = vpop.f32.mrb[0].mxu0
      %592 = vmatprep.mubr.bf16.mxu0 0
      %593 = vmatmul.mubr.bf16.gmra.mrb[0].mxu0 %v448
      %v594 = vpop.f32.mrb[0].mxu0
      %v595 = vadd.f32 %v319, %v594
      %v596 = vpop.f32.mrb[0].mxu0
      %v597 = vpop.f32.mrb[0].mxu0
      %v598 = vadd.f32 %v319, %v597
      %v599 = vpop.f32.mrb[0].mxu0
      %600 = vmatprep.mubr.bf16.mxu0 0
      %601 = vmatmul.mubr.bf16.gmra.mrb[0].mxu0 %v451
      %v602 = vpop.f32.mrb[0].mxu0
      %v603 = vadd.f32 %v319, %v602
      %v604 = vpop.f32.mrb[0].mxu0
      %v605 = vpop.f32.mrb[0].mxu0
      %v606 = vadd.f32 %v319, %v605
      %v607 = vpop.f32.mrb[0].mxu0
      %608 = vmatprep.mubr.bf16.mxu0 0
      %609 = vmatmul.mubr.bf16.gmra.mrb[0].mxu0 %v454
      %v610 = vpop.f32.mrb[0].mxu0
      %v611 = vadd.f32 %v319, %v610
      %v612 = vpop.f32.mrb[0].mxu0
      %v613 = vpop.f32.mrb[0].mxu0
      %v614 = vadd.f32 %v319, %v613
      %v615 = vpop.f32.mrb[0].mxu0
      %616 = vdwg.mxu0
      %v617 = vmax.f32 %v491, 0.0
      %v618 = vmax.f32 %v494, 0.0
      %v619 = vmax.f32 %v499, 0.0
      %v620 = vmax.f32 %v502, 0.0
      %v621 = vmax.f32 %v507, 0.0
      %v622 = vmax.f32 %v510, 0.0
      %v623 = vmax.f32 %v515, 0.0
      %v624 = vmax.f32 %v518, 0.0
      %v625 = vmax.f32 %v523, 0.0
      %v626 = vmax.f32 %v526, 0.0
      %v627 = vmax.f32 %v531, 0.0
      %v628 = vmax.f32 %v534, 0.0
      %v629 = vmax.f32 %v539, 0.0
      %v630 = vmax.f32 %v542, 0.0
      %v631 = vmax.f32 %v547, 0.0
      %v632 = vmax.f32 %v550, 0.0
      %v633 = vmax.f32 %v555, 0.0
      %v634 = vmax.f32 %v558, 0.0
      %v635 = vmax.f32 %v563, 0.0
      %v636 = vmax.f32 %v566, 0.0
      %v637 = vmax.f32 %v571, 0.0
      %v638 = vmax.f32 %v574, 0.0
      %v639 = vmax.f32 %v579, 0.0
      %v640 = vmax.f32 %v582, 0.0
      %v641 = vmax.f32 %v587, 0.0
      %v642 = vmax.f32 %v590, 0.0
      %v643 = vmax.f32 %v595, 0.0
      %v644 = vmax.f32 %v598, 0.0
      %v645 = vmax.f32 %v603, 0.0
      %v646 = vmax.f32 %v606, 0.0
      %v647 = vmax.f32 %v611, 0.0
      %v648 = vmax.f32 %v614, 0.0
      %v649 = vlaneseq
      %v650 = vshrl.u32 %v649, 7
      %v651 = vadd.s32 %v650, 8
      %vm652 = vcmp.gt.s32.totalorder %v650, 0
      %vm653 = vcmp.gt.s32.totalorder %v651, 0
      %v654 = vsel %vm652, 1, 0
      %v655 = vsel %vm653, 1, 0
      %v656 = vcvt.s32.f32 %v654
      %v657 = vcvt.s32.f32 %v655
      %vm658 = vcmp.lt.s32.totalorder %v650, 15
      %vm659 = vcmp.lt.s32.totalorder %v651, 15
      %v660 = vsel %vm658, 1, 0
      %v661 = vsel %vm659, 1, 0
      %v662 = vcvt.s32.f32 %v660
      %v663 = vcvt.s32.f32 %v661
      %vm664 = vcmask 31744
      %665 = vst.msk [vmem:[#allocation2] sm:$0xff] %vm664, 0
      %vm666 = vcmask 24576
      %vm667 = vsmask.f32 256
      %vm668 = vmand %vm666, %vm667
      %v669 = vld [vmem:[#allocation2 + $0x8] sm:$0x1]
      %v670 = vsel %vm668, 0, %v669
      %671 = vst [vmem:[#allocation2 + $0x8] sm:$0x1] %v670
      %vm672 = vcmask 31751
      %vm673 = vsmask.f32 7966
      %vm674 = vmand %vm672, %vm673
      %v675 = vld [vmem:[#allocation2 + $0x80] sm:$0x80]
      %v676 = vsel %vm674, 0, %v675
      %677 = vst [vmem:[#allocation2 + $0x80] sm:$0x80] %v676
      %678 = vst.msk [vmem:[#allocation2 + $0x88] sm:$0xff] %vm664, 0
      %s679 = scalar_lea.vmem [#allocation2], 144
      %680 = vst.msk [vmem:[%s679] sm:$0xff] %vm664, 0
      %v681 = vld [vmem:[%s679 + $0x8] sm:$0x1]
      %v682 = vsel %vm668, 0, %v681
      %683 = vst [vmem:[%s679 + $0x8] sm:$0x1] %v682
      %v684 = vld [vmem:[%s679 + $0x80] sm:$0x80]
      %v685 = vsel %vm674, 0, %v684
      %686 = vst [vmem:[%s679 + $0x80] sm:$0x80] %v685
      %687 = vst.msk [vmem:[%s679 + $0x88] sm:$0xff] %vm664, 0
      %s688 = scalar_lea.vmem [#allocation2], 288
      %689 = vst.msk [vmem:[%s688] sm:$0xff] %vm664, 0
      %v690 = vld [vmem:[%s688 + $0x8] sm:$0x1]
      %v691 = vsel %vm668, 0, %v690
      %692 = vst [vmem:[%s688 + $0x8] sm:$0x1] %v691
      %v693 = vld [vmem:[%s688 + $0x80] sm:$0x80]
      %v694 = vsel %vm674, 0, %v693
      %695 = vst [vmem:[%s688 + $0x80] sm:$0x80] %v694
      %696 = vst.msk [vmem:[%s688 + $0x88] sm:$0xff] %vm664, 0
      %v697 = vmul.f32 %v617, %v662
      %v698 = vmul.f32 %v618, %v663
      %v699 = vmul.f32 %v619, %v662
      %v700 = vmul.f32 %v620, %v663
      %v701 = vmul.f32 %v621, %v662
      %v702 = vmul.f32 %v622, %v663
      %v703 = vmul.f32 %v623, %v662
      %v704 = vmul.f32 %v624, %v663
      %v705 = vmul.f32 %v625, %v662
      %v706 = vmul.f32 %v626, %v663
      %v707 = vmul.f32 %v627, %v662
      %v708 = vmul.f32 %v628, %v663
      %v709 = vmul.f32 %v629, %v662
      %v710 = vmul.f32 %v630, %v663
      %v711 = vmul.f32 %v631, %v662
      %v712 = vmul.f32 %v632, %v663
      %v713 = vmul.f32 %v633, %v662
      %v714 = vmul.f32 %v634, %v663
      %v715 = vmul.f32 %v635, %v662
      %v716 = vmul.f32 %v636, %v663
      %v717 = vmul.f32 %v637, %v662
      %v718 = vmul.f32 %v638, %v663
      %v719 = vmul.f32 %v639, %v662
      %v720 = vmul.f32 %v640, %v663
      %v721 = vmul.f32 %v641, %v662
      %v722 = vmul.f32 %v642, %v663
      %v723 = vmul.f32 %v643, %v662
      %v724 = vmul.f32 %v644, %v663
      %v725 = vmul.f32 %v645, %v662
      %v726 = vmul.f32 %v646, %v663
      %v727 = vmul.f32 %v647, %v662
      %v728 = vmul.f32 %v648, %v663
      %v729 = vpack.c.bf16 %v698, %v697
      %v730 = vpack.c.bf16 %v700, %v699
      %v731 = vpack.c.bf16 %v702, %v701
      %v732 = vpack.c.bf16 %v704, %v703
      %v733 = vpack.c.bf16 %v706, %v705
      %v734 = vpack.c.bf16 %v708, %v707
      %v735 = vpack.c.bf16 %v710, %v709
      %v736 = vpack.c.bf16 %v712, %v711
      %v737 = vpack.c.bf16 %v714, %v713
      %v738 = vpack.c.bf16 %v716, %v715
      %v739 = vpack.c.bf16 %v718, %v717
      %v740 = vpack.c.bf16 %v720, %v719
      %v741 = vpack.c.bf16 %v722, %v721
      %v742 = vpack.c.bf16 %v724, %v723
      %v743 = vpack.c.bf16 %v726, %v725
      %v744 = vpack.c.bf16 %v728, %v727
      %v746 = vshrl.u32 %v729, 16
      %v748 = vrot.slane %v746, 7
      %v749 = vshll.u32 %v729, 16
      %v751 = vor.u32 %v748, %v749
      %v753 = vshrl.u32 %v730, 16
      %v755 = vrot.slane %v753, 7
      %v756 = vshll.u32 %v730, 16
      %v758 = vor.u32 %v755, %v756
      %v759 = vsel %vm667, %v748, %v758
      %v761 = vshrl.u32 %v731, 16
      %v763 = vrot.slane %v761, 7
      %v764 = vshll.u32 %v731, 16
      %v766 = vor.u32 %v763, %v764
      %v767 = vsel %vm667, %v755, %v766
      %v769 = vshrl.u32 %v732, 16
      %v771 = vrot.slane %v769, 7
      %v772 = vshll.u32 %v732, 16
      %v774 = vor.u32 %v771, %v772
      %v775 = vsel %vm667, %v763, %v774
      %v777 = vshrl.u32 %v733, 16
      %v779 = vrot.slane %v777, 7
      %v780 = vshll.u32 %v733, 16
      %v782 = vor.u32 %v779, %v780
      %v783 = vsel %vm667, %v771, %v782
      %v785 = vshrl.u32 %v734, 16
      %v787 = vrot.slane %v785, 7
      %v788 = vshll.u32 %v734, 16
      %v790 = vor.u32 %v787, %v788
      %v791 = vsel %vm667, %v779, %v790
      %v793 = vshrl.u32 %v735, 16
      %v795 = vrot.slane %v793, 7
      %v796 = vshll.u32 %v735, 16
      %v798 = vor.u32 %v795, %v796
      %v799 = vsel %vm667, %v787, %v798
      %v801 = vshrl.u32 %v736, 16
      %v803 = vrot.slane %v801, 7
      %v804 = vshll.u32 %v736, 16
      %v806 = vor.u32 %v803, %v804
      %v807 = vsel %vm667, %v795, %v806
      %v809 = vshrl.u32 %v737, 16
      %v811 = vrot.slane %v809, 7
      %v812 = vshll.u32 %v737, 16
      %v814 = vor.u32 %v811, %v812
      %v815 = vsel %vm667, %v803, %v814
      %v817 = vshrl.u32 %v738, 16
      %v819 = vrot.slane %v817, 7
      %v820 = vshll.u32 %v738, 16
      %v822 = vor.u32 %v819, %v820
      %v823 = vsel %vm667, %v811, %v822
      %v825 = vshrl.u32 %v739, 16
      %v827 = vrot.slane %v825, 7
      %v828 = vshll.u32 %v739, 16
      %v830 = vor.u32 %v827, %v828
      %v831 = vsel %vm667, %v819, %v830
      %v833 = vshrl.u32 %v740, 16
      %v835 = vrot.slane %v833, 7
      %v836 = vshll.u32 %v740, 16
      %v838 = vor.u32 %v835, %v836
      %v839 = vsel %vm667, %v827, %v838
      %v841 = vshrl.u32 %v741, 16
      %v843 = vrot.slane %v841, 7
      %v844 = vshll.u32 %v741, 16
      %v846 = vor.u32 %v843, %v844
      %v847 = vsel %vm667, %v835, %v846
      %v849 = vshrl.u32 %v742, 16
      %v851 = vrot.slane %v849, 7
      %v852 = vshll.u32 %v742, 16
      %v854 = vor.u32 %v851, %v852
      %v855 = vsel %vm667, %v843, %v854
      %v857 = vshrl.u32 %v743, 16
      %v859 = vrot.slane %v857, 7
      %v860 = vshll.u32 %v743, 16
      %v862 = vor.u32 %v859, %v860
      %v863 = vsel %vm667, %v851, %v862
      %v865 = vshrl.u32 %v744, 16
      %v867 = vrot.slane %v865, 7
      %v868 = vshll.u32 %v744, 16
      %v870 = vor.u32 %v867, %v868
      %v871 = vsel %vm667, %v859, %v870
      %vm889 = vcmask 31744
      %vm890 = vsmask.f32 7938
      %vm891 = vmand %vm889, %vm890
      %v892 = vld [vmem:[#allocation2 + $0x8] sm:$0xff]
      %v893 = vsel %vm891, %v751, %v892
      %894 = vst [vmem:[#allocation2 + $0x8] sm:$0xff] %v893
      %895 = vst.msk [vmem:[#allocation2 + $0x10] sm:$0xff] %vm664, %v759
      %896 = vst.msk [vmem:[#allocation2 + $0x18] sm:$0xff] %vm664, %v767
      %897 = vst.msk [vmem:[#allocation2 + $0x20] sm:$0xff] %vm664, %v775
      %898 = vst.msk [vmem:[#allocation2 + $0x28] sm:$0xff] %vm664, %v783
      %899 = vst.msk [vmem:[#allocation2 + $0x30] sm:$0xff] %vm664, %v791
      %900 = vst.msk [vmem:[#allocation2 + $0x38] sm:$0xff] %vm664, %v799
      %901 = vst.msk [vmem:[#allocation2 + $0x40] sm:$0xff] %vm664, %v807
      %902 = vst.msk [vmem:[#allocation2 + $0x48] sm:$0xff] %vm664, %v815
      %903 = vst.msk [vmem:[#allocation2 + $0x50] sm:$0xff] %vm664, %v823
      %904 = vst.msk [vmem:[#allocation2 + $0x58] sm:$0xff] %vm664, %v831
      %905 = vst.msk [vmem:[#allocation2 + $0x60] sm:$0xff] %vm664, %v839
      %906 = vst.msk [vmem:[#allocation2 + $0x68] sm:$0xff] %vm664, %v847
      %907 = vst.msk [vmem:[#allocation2 + $0x70] sm:$0xff] %vm664, %v855
      %908 = vst.msk [vmem:[#allocation2 + $0x78] sm:$0xff] %vm664, %v863
      %909 = vst.msk [vmem:[#allocation2 + $0x80] sm:$0xff] %vm664, %v871
      %v910 = vld [vmem:[#allocation2 + $0x88] sm:$0x1]
      %v911 = vsel %vm668, %v867, %v910
      %912 = vst [vmem:[#allocation2 + $0x88] sm:$0x1] %v911
      %v913 = vpack.c.bf16 %v618, %v617
      %v914 = vpack.c.bf16 %v620, %v619
      %v915 = vpack.c.bf16 %v622, %v621
      %v916 = vpack.c.bf16 %v624, %v623
      %v917 = vpack.c.bf16 %v626, %v625
      %v918 = vpack.c.bf16 %v628, %v627
      %v919 = vpack.c.bf16 %v630, %v629
      %v920 = vpack.c.bf16 %v632, %v631
      %v921 = vpack.c.bf16 %v634, %v633
      %v922 = vpack.c.bf16 %v636, %v635
      %v923 = vpack.c.bf16 %v638, %v637
      %v924 = vpack.c.bf16 %v640, %v639
      %v925 = vpack.c.bf16 %v642, %v641
      %v926 = vpack.c.bf16 %v644, %v643
      %v927 = vpack.c.bf16 %v646, %v645
      %v928 = vpack.c.bf16 %v648, %v647
      %929 = vst.msk [vmem:[%s679 + $0x8] sm:$0xff] %vm664, %v913
      %930 = vst.msk [vmem:[%s679 + $0x10] sm:$0xff] %vm664, %v914
      %931 = vst.msk [vmem:[%s679 + $0x18] sm:$0xff] %vm664, %v915
      %932 = vst.msk [vmem:[%s679 + $0x20] sm:$0xff] %vm664, %v916
      %933 = vst.msk [vmem:[%s679 + $0x28] sm:$0xff] %vm664, %v917
      %934 = vst.msk [vmem:[%s679 + $0x30] sm:$0xff] %vm664, %v918
      %935 = vst.msk [vmem:[%s679 + $0x38] sm:$0xff] %vm664, %v919
      %936 = vst.msk [vmem:[%s679 + $0x40] sm:$0xff] %vm664, %v920
      %937 = vst.msk [vmem:[%s679 + $0x48] sm:$0xff] %vm664, %v921
      %938 = vst.msk [vmem:[%s679 + $0x50] sm:$0xff] %vm664, %v922
      %939 = vst.msk [vmem:[%s679 + $0x58] sm:$0xff] %vm664, %v923
      %940 = vst.msk [vmem:[%s679 + $0x60] sm:$0xff] %vm664, %v924
      %941 = vst.msk [vmem:[%s679 + $0x68] sm:$0xff] %vm664, %v925
      %942 = vst.msk [vmem:[%s679 + $0x70] sm:$0xff] %vm664, %v926
      %943 = vst.msk [vmem:[%s679 + $0x78] sm:$0xff] %vm664, %v927
      %944 = vst.msk [vmem:[%s679 + $0x80] sm:$0xff] %vm664, %v928
      %v945 = vmul.f32 %v617, %v656
      %v946 = vmul.f32 %v618, %v657
      %v947 = vmul.f32 %v619, %v656
      %v948 = vmul.f32 %v620, %v657
      %v949 = vmul.f32 %v621, %v656
      %v950 = vmul.f32 %v622, %v657
      %v951 = vmul.f32 %v623, %v656
      %v952 = vmul.f32 %v624, %v657
      %v953 = vmul.f32 %v625, %v656
      %v954 = vmul.f32 %v626, %v657
      %v955 = vmul.f32 %v627, %v656
      %v956 = vmul.f32 %v628, %v657
      %v957 = vmul.f32 %v629, %v656
      %v958 = vmul.f32 %v630, %v657
      %v959 = vmul.f32 %v631, %v656
      %v960 = vmul.f32 %v632, %v657
      %v961 = vmul.f32 %v633, %v656
      %v962 = vmul.f32 %v634, %v657
      %v963 = vmul.f32 %v635, %v656
      %v964 = vmul.f32 %v636, %v657
      %v965 = vmul.f32 %v637, %v656
      %v966 = vmul.f32 %v638, %v657
      %v967 = vmul.f32 %v639, %v656
      %v968 = vmul.f32 %v640, %v657
      %v969 = vmul.f32 %v641, %v656
      %v970 = vmul.f32 %v642, %v657
      %v971 = vmul.f32 %v643, %v656
      %v972 = vmul.f32 %v644, %v657
      %v973 = vmul.f32 %v645, %v656
      %v974 = vmul.f32 %v646, %v657
      %v975 = vmul.f32 %v647, %v656
      %v976 = vmul.f32 %v648, %v657
      %v977 = vpack.c.bf16 %v946, %v945
      %v978 = vpack.c.bf16 %v948, %v947
      %v979 = vpack.c.bf16 %v950, %v949
      %v980 = vpack.c.bf16 %v952, %v951
      %v981 = vpack.c.bf16 %v954, %v953
      %v982 = vpack.c.bf16 %v956, %v955
      %v983 = vpack.c.bf16 %v958, %v957
      %v984 = vpack.c.bf16 %v960, %v959
      %v985 = vpack.c.bf16 %v962, %v961
      %v986 = vpack.c.bf16 %v964, %v963
      %v987 = vpack.c.bf16 %v966, %v965
      %v988 = vpack.c.bf16 %v968, %v967
      %v989 = vpack.c.bf16 %v970, %v969
      %v990 = vpack.c.bf16 %v972, %v971
      %v991 = vpack.c.bf16 %v974, %v973
      %v992 = vpack.c.bf16 %v976, %v975
      %vm993 = vsmask.f32 7424
      %v995 = vshll.u32 %v977, 16
      %v997 = vrot.slane %v995, 1
      %v998 = vshrl.u32 %v977, 16
      %v1000 = vor.u32 %v998, %v997
      %v1002 = vshll.u32 %v978, 16
      %v1004 = vrot.slane %v1002, 1
      %v1005 = vsel %vm993, %v1000, %v1004
      %v1006 = vshrl.u32 %v978, 16
      %v1008 = vor.u32 %v1006, %v1004
      %v1010 = vshll.u32 %v979, 16
      %v1012 = vrot.slane %v1010, 1
      %v1013 = vsel %vm993, %v1008, %v1012
      %v1014 = vshrl.u32 %v979, 16
      %v1016 = vor.u32 %v1014, %v1012
      %v1018 = vshll.u32 %v980, 16
      %v1020 = vrot.slane %v1018, 1
      %v1021 = vsel %vm993, %v1016, %v1020
      %v1022 = vshrl.u32 %v980, 16
      %v1024 = vor.u32 %v1022, %v1020
      %v1026 = vshll.u32 %v981, 16
      %v1028 = vrot.slane %v1026, 1
      %v1029 = vsel %vm993, %v1024, %v1028
      %v1030 = vshrl.u32 %v981, 16
      %v1032 = vor.u32 %v1030, %v1028
      %v1034 = vshll.u32 %v982, 16
      %v1036 = vrot.slane %v1034, 1
      %v1037 = vsel %vm993, %v1032, %v1036
      %v1038 = vshrl.u32 %v982, 16
      %v1040 = vor.u32 %v1038, %v1036
      %v1042 = vshll.u32 %v983, 16
      %v1044 = vrot.slane %v1042, 1
      %v1045 = vsel %vm993, %v1040, %v1044
      %v1046 = vshrl.u32 %v983, 16
      %v1048 = vor.u32 %v1046, %v1044
      %v1050 = vshll.u32 %v984, 16
      %v1052 = vrot.slane %v1050, 1
      %v1053 = vsel %vm993, %v1048, %v1052
      %v1054 = vshrl.u32 %v984, 16
      %v1056 = vor.u32 %v1054, %v1052
      %v1058 = vshll.u32 %v985, 16
      %v1060 = vrot.slane %v1058, 1
      %v1061 = vsel %vm993, %v1056, %v1060
      %v1062 = vshrl.u32 %v985, 16
      %v1064 = vor.u32 %v1062, %v1060
      %v1066 = vshll.u32 %v986, 16
      %v1068 = vrot.slane %v1066, 1
      %v1069 = vsel %vm993, %v1064, %v1068
      %v1070 = vshrl.u32 %v986, 16
      %v1072 = vor.u32 %v1070, %v1068
      %v1074 = vshll.u32 %v987, 16
      %v1076 = vrot.slane %v1074, 1
      %v1077 = vsel %vm993, %v1072, %v1076
      %v1078 = vshrl.u32 %v987, 16
      %v1080 = vor.u32 %v1078, %v1076
      %v1082 = vshll.u32 %v988, 16
      %v1084 = vrot.slane %v1082, 1
      %v1085 = vsel %vm993, %v1080, %v1084
      %v1086 = vshrl.u32 %v988, 16
      %v1088 = vor.u32 %v1086, %v1084
      %v1090 = vshll.u32 %v989, 16
      %v1092 = vrot.slane %v1090, 1
      %v1093 = vsel %vm993, %v1088, %v1092
      %v1094 = vshrl.u32 %v989, 16
      %v1096 = vor.u32 %v1094, %v1092
      %v1098 = vshll.u32 %v990, 16
      %v1100 = vrot.slane %v1098, 1
      %v1101 = vsel %vm993, %v1096, %v1100
      %v1102 = vshrl.u32 %v990, 16
      %v1104 = vor.u32 %v1102, %v1100
      %v1106 = vshll.u32 %v991, 16
      %v1108 = vrot.slane %v1106, 1
      %v1109 = vsel %vm993, %v1104, %v1108
      %v1110 = vshrl.u32 %v991, 16
      %v1112 = vor.u32 %v1110, %v1108
      %v1114 = vshll.u32 %v992, 16
      %v1116 = vrot.slane %v1114, 1
      %v1117 = vsel %vm993, %v1112, %v1116
      %v1118 = vshrl.u32 %v992, 16
      %v1120 = vor.u32 %v1118, %v1116
      %v1138 = vld [vmem:[%s688] sm:$0x80]
      %v1139 = vsel %vm674, %v997, %v1138
      %1140 = vst [vmem:[%s688] sm:$0x80] %v1139
      %1141 = vst.msk [vmem:[%s688 + $0x8] sm:$0xff] %vm664, %v1005
      %1142 = vst.msk [vmem:[%s688 + $0x10] sm:$0xff] %vm664, %v1013
      %1143 = vst.msk [vmem:[%s688 + $0x18] sm:$0xff] %vm664, %v1021
      %1144 = vst.msk [vmem:[%s688 + $0x20] sm:$0xff] %vm664, %v1029
      %1145 = vst.msk [vmem:[%s688 + $0x28] sm:$0xff] %vm664, %v1037
      %1146 = vst.msk [vmem:[%s688 + $0x30] sm:$0xff] %vm664, %v1045
      %1147 = vst.msk [vmem:[%s688 + $0x38] sm:$0xff] %vm664, %v1053
      %1148 = vst.msk [vmem:[%s688 + $0x40] sm:$0xff] %vm664, %v1061
      %1149 = vst.msk [vmem:[%s688 + $0x48] sm:$0xff] %vm664, %v1069
      %1150 = vst.msk [vmem:[%s688 + $0x50] sm:$0xff] %vm664, %v1077
      %1151 = vst.msk [vmem:[%s688 + $0x58] sm:$0xff] %vm664, %v1085
      %1152 = vst.msk [vmem:[%s688 + $0x60] sm:$0xff] %vm664, %v1093
      %1153 = vst.msk [vmem:[%s688 + $0x68] sm:$0xff] %vm664, %v1101
      %1154 = vst.msk [vmem:[%s688 + $0x70] sm:$0xff] %vm664, %v1109
      %1155 = vst.msk [vmem:[%s688 + $0x78] sm:$0xff] %vm664, %v1117
      %vm1156 = vmand %vm889, %vm993
      %v1157 = vld [vmem:[%s688 + $0x80] sm:$0xff]
      %v1158 = vsel %vm1156, %v1120, %v1157
      %1159 = vst [vmem:[%s688 + $0x80] sm:$0xff] %v1158
      %v1160 = vld [vmem:[#allocation2] sm:$0xff]
      %v1161 = vld [vmem:[#allocation2 + $0x8] sm:$0xff]
      %v1162 = vld [vmem:[#allocation2 + $0x10] sm:$0xff]
      %v1163 = vld [vmem:[#allocation2 + $0x18] sm:$0xff]
      %v1164 = vld [vmem:[#allocation2 + $0x20] sm:$0xff]
      %v1165 = vld [vmem:[#allocation2 + $0x28] sm:$0xff]
      %v1166 = vld [vmem:[#allocation2 + $0x30] sm:$0xff]
      %v1167 = vld [vmem:[#allocation2 + $0x38] sm:$0xff]
      %v1168 = vld [vmem:[#allocation2 + $0x40] sm:$0xff]
      %v1169 = vld [vmem:[#allocation2 + $0x48] sm:$0xff]
      %v1170 = vld [vmem:[#allocation2 + $0x50] sm:$0xff]
      %v1171 = vld [vmem:[#allocation2 + $0x58] sm:$0xff]
      %v1172 = vld [vmem:[#allocation2 + $0x60] sm:$0xff]
      %v1173 = vld [vmem:[#allocation2 + $0x68] sm:$0xff]
      %v1174 = vld [vmem:[#allocation2 + $0x70] sm:$0xff]
      %v1175 = vld [vmem:[#allocation2 + $0x78] sm:$0xff]
      %v1176 = vld [vmem:[%s679] sm:$0xff]
      %v1177 = vld [vmem:[%s679 + $0x8] sm:$0xff]
      %v1178 = vld [vmem:[%s679 + $0x10] sm:$0xff]
      %v1179 = vld [vmem:[%s679 + $0x18] sm:$0xff]
      %v1180 = vld [vmem:[%s679 + $0x20] sm:$0xff]
      %v1181 = vld [vmem:[%s679 + $0x28] sm:$0xff]
      %v1182 = vld [vmem:[%s679 + $0x30] sm:$0xff]
      %v1183 = vld [vmem:[%s679 + $0x38] sm:$0xff]
      %v1184 = vld [vmem:[%s679 + $0x40] sm:$0xff]
      %v1185 = vld [vmem:[%s679 + $0x48] sm:$0xff]
      %v1186 = vld [vmem:[%s679 + $0x50] sm:$0xff]
      %v1187 = vld [vmem:[%s679 + $0x58] sm:$0xff]
      %v1188 = vld [vmem:[%s679 + $0x60] sm:$0xff]
      %v1189 = vld [vmem:[%s679 + $0x68] sm:$0xff]
      %v1190 = vld [vmem:[%s679 + $0x70] sm:$0xff]
      %v1191 = vld [vmem:[%s679 + $0x78] sm:$0xff]
      %v1192 = vld [vmem:[%s688] sm:$0xff]
      %v1193 = vld [vmem:[%s688 + $0x8] sm:$0xff]
      %v1194 = vld [vmem:[%s688 + $0x10] sm:$0xff]
      %v1195 = vld [vmem:[%s688 + $0x18] sm:$0xff]
      %v1196 = vld [vmem:[%s688 + $0x20] sm:$0xff]
      %v1197 = vld [vmem:[%s688 + $0x28] sm:$0xff]
      %v1198 = vld [vmem:[%s688 + $0x30] sm:$0xff]
      %v1199 = vld [vmem:[%s688 + $0x38] sm:$0xff]
      %v1200 = vld [vmem:[%s688 + $0x40] sm:$0xff]
      %v1201 = vld [vmem:[%s688 + $0x48] sm:$0xff]
      %v1202 = vld [vmem:[%s688 + $0x50] sm:$0xff]
      %v1203 = vld [vmem:[%s688 + $0x58] sm:$0xff]
      %v1204 = vld [vmem:[%s688 + $0x60] sm:$0xff]
      %v1205 = vld [vmem:[%s688 + $0x68] sm:$0xff]
      %v1206 = vld [vmem:[%s688 + $0x70] sm:$0xff]
      %v1207 = vld [vmem:[%s688 + $0x78] sm:$0xff]
      %v1208 = vld [vmem:[#allocation2 + $0x80] sm:$0xff]
      %v1209 = vld [vmem:[%s679 + $0x80] sm:$0xff]
      %v1210 = vld [vmem:[%s688 + $0x80] sm:$0xff]
      %v1211 = vld [vmem:[#allocation2 + $0x88] sm:$0xff]
      %v1212 = vld [vmem:[%s679 + $0x88] sm:$0xff]
      %v1213 = vld [vmem:[%s688 + $0x88] sm:$0xff]
      %1230 = vrot.lane.b32.xlu0 %v1176, 4
      %v1231 = vpop.permute.xlu0 %1230
      %1232 = vrot.lane.b32.xlu0 %v1177, 4
      %v1233 = vpop.permute.xlu0 %1232
      %1234 = vrot.lane.b32.xlu0 %v1178, 4
      %v1235 = vpop.permute.xlu0 %1234
      %1236 = vrot.lane.b32.xlu0 %v1179, 4
      %v1237 = vpop.permute.xlu0 %1236
      %1238 = vrot.lane.b32.xlu0 %v1180, 4
      %v1239 = vpop.permute.xlu0 %1238
      %1240 = vrot.lane.b32.xlu0 %v1181, 4
      %v1241 = vpop.permute.xlu0 %1240
      %1242 = vrot.lane.b32.xlu0 %v1182, 4
      %v1243 = vpop.permute.xlu0 %1242
      %1244 = vrot.lane.b32.xlu0 %v1183, 4
      %v1245 = vpop.permute.xlu0 %1244
      %1246 = vrot.lane.b32.xlu0 %v1184, 4
      %v1247 = vpop.permute.xlu0 %1246
      %1248 = vrot.lane.b32.xlu0 %v1185, 4
      %v1249 = vpop.permute.xlu0 %1248
      %1250 = vrot.lane.b32.xlu0 %v1186, 4
      %v1251 = vpop.permute.xlu0 %1250
      %1252 = vrot.lane.b32.xlu0 %v1187, 4
      %v1253 = vpop.permute.xlu0 %1252
      %1254 = vrot.lane.b32.xlu0 %v1188, 4
      %v1255 = vpop.permute.xlu0 %1254
      %1256 = vrot.lane.b32.xlu0 %v1189, 4
      %v1257 = vpop.permute.xlu0 %1256
      %1258 = vrot.lane.b32.xlu0 %v1190, 4
      %v1259 = vpop.permute.xlu0 %1258
      %1260 = vrot.lane.b32.xlu0 %v1191, 4
      %v1261 = vpop.permute.xlu0 %1260
      %1278 = vrot.lane.b32.xlu0 %v1192, 8
      %v1279 = vpop.permute.xlu0 %1278
      %1280 = vrot.lane.b32.xlu0 %v1193, 8
      %v1281 = vpop.permute.xlu0 %1280
      %1282 = vrot.lane.b32.xlu0 %v1194, 8
      %v1283 = vpop.permute.xlu0 %1282
      %1284 = vrot.lane.b32.xlu0 %v1195, 8
      %v1285 = vpop.permute.xlu0 %1284
      %1286 = vrot.lane.b32.xlu0 %v1196, 8
      %v1287 = vpop.permute.xlu0 %1286
      %1288 = vrot.lane.b32.xlu0 %v1197, 8
      %v1289 = vpop.permute.xlu0 %1288
      %1290 = vrot.lane.b32.xlu0 %v1198, 8
      %v1291 = vpop.permute.xlu0 %1290
      %1292 = vrot.lane.b32.xlu0 %v1199, 8
      %v1293 = vpop.permute.xlu0 %1292
      %1294 = vrot.lane.b32.xlu0 %v1200, 8
      %v1295 = vpop.permute.xlu0 %1294
      %1296 = vrot.lane.b32.xlu0 %v1201, 8
      %v1297 = vpop.permute.xlu0 %1296
      %1298 = vrot.lane.b32.xlu0 %v1202, 8
      %v1299 = vpop.permute.xlu0 %1298
      %1300 = vrot.lane.b32.xlu0 %v1203, 8
      %v1301 = vpop.permute.xlu0 %1300
      %1302 = vrot.lane.b32.xlu0 %v1204, 8
      %v1303 = vpop.permute.xlu0 %1302
      %1304 = vrot.lane.b32.xlu0 %v1205, 8
      %v1305 = vpop.permute.xlu0 %1304
      %1306 = vrot.lane.b32.xlu0 %v1206, 8
      %v1307 = vpop.permute.xlu0 %1306
      %1308 = vrot.lane.b32.xlu0 %v1207, 8
      %v1309 = vpop.permute.xlu0 %1308
      %1326 = vrot.lane.b32.xlu0 %v1161, 12
      %v1327 = vpop.permute.xlu0 %1326
      %1328 = vrot.lane.b32.xlu0 %v1162, 12
      %v1329 = vpop.permute.xlu0 %1328
      %1330 = vrot.lane.b32.xlu0 %v1163, 12
      %v1331 = vpop.permute.xlu0 %1330
      %1332 = vrot.lane.b32.xlu0 %v1164, 12
      %v1333 = vpop.permute.xlu0 %1332
      %1334 = vrot.lane.b32.xlu0 %v1165, 12
      %v1335 = vpop.permute.xlu0 %1334
      %1336 = vrot.lane.b32.xlu0 %v1166, 12
      %v1337 = vpop.permute.xlu0 %1336
      %1338 = vrot.lane.b32.xlu0 %v1167, 12
      %v1339 = vpop.permute.xlu0 %1338
      %1340 = vrot.lane.b32.xlu0 %v1168, 12
      %v1341 = vpop.permute.xlu0 %1340
      %1342 = vrot.lane.b32.xlu0 %v1169, 12
      %v1343 = vpop.permute.xlu0 %1342
      %1344 = vrot.lane.b32.xlu0 %v1170, 12
      %v1345 = vpop.permute.xlu0 %1344
      %1346 = vrot.lane.b32.xlu0 %v1171, 12
      %v1347 = vpop.permute.xlu0 %1346
      %1348 = vrot.lane.b32.xlu0 %v1172, 12
      %v1349 = vpop.permute.xlu0 %1348
      %1350 = vrot.lane.b32.xlu0 %v1173, 12
      %v1351 = vpop.permute.xlu0 %1350
      %1352 = vrot.lane.b32.xlu0 %v1174, 12
      %v1353 = vpop.permute.xlu0 %1352
      %1354 = vrot.lane.b32.xlu0 %v1175, 12
      %v1355 = vpop.permute.xlu0 %1354
      %1356 = vrot.lane.b32.xlu0 %v1208, 12
      %v1357 = vpop.permute.xlu0 %1356
      %1359 = vrot.lane.b32.xlu0 %v1177, 16
      %v1360 = vpop.permute.xlu0 %1359
      %1361 = vrot.lane.b32.xlu0 %v1178, 16
      %v1362 = vpop.permute.xlu0 %1361
      %1363 = vrot.lane.b32.xlu0 %v1179, 16
      %v1364 = vpop.permute.xlu0 %1363
      %1365 = vrot.lane.b32.xlu0 %v1180, 16
      %v1366 = vpop.permute.xlu0 %1365
      %1367 = vrot.lane.b32.xlu0 %v1181, 16
      %v1368 = vpop.permute.xlu0 %1367
      %1369 = vrot.lane.b32.xlu0 %v1182, 16
      %v1370 = vpop.permute.xlu0 %1369
      %1371 = vrot.lane.b32.xlu0 %v1183, 16
      %v1372 = vpop.permute.xlu0 %1371
      %1373 = vrot.lane.b32.xlu0 %v1184, 16
      %v1374 = vpop.permute.xlu0 %1373
      %1375 = vrot.lane.b32.xlu0 %v1185, 16
      %v1376 = vpop.permute.xlu0 %1375
      %1377 = vrot.lane.b32.xlu0 %v1186, 16
      %v1378 = vpop.permute.xlu0 %1377
      %1379 = vrot.lane.b32.xlu0 %v1187, 16
      %v1380 = vpop.permute.xlu0 %1379
      %1381 = vrot.lane.b32.xlu0 %v1188, 16
      %v1382 = vpop.permute.xlu0 %1381
      %1383 = vrot.lane.b32.xlu0 %v1189, 16
      %v1384 = vpop.permute.xlu0 %1383
      %1385 = vrot.lane.b32.xlu0 %v1190, 16
      %v1386 = vpop.permute.xlu0 %1385
      %1387 = vrot.lane.b32.xlu0 %v1191, 16
      %v1388 = vpop.permute.xlu0 %1387
      %1389 = vrot.lane.b32.xlu0 %v1209, 16
      %v1390 = vpop.permute.xlu0 %1389
      %1392 = vrot.lane.b32.xlu0 %v1193, 20
      %v1393 = vpop.permute.xlu0 %1392
      %1394 = vrot.lane.b32.xlu0 %v1194, 20
      %v1395 = vpop.permute.xlu0 %1394
      %1396 = vrot.lane.b32.xlu0 %v1195, 20
      %v1397 = vpop.permute.xlu0 %1396
      %1398 = vrot.lane.b32.xlu0 %v1196, 20
      %v1399 = vpop.permute.xlu0 %1398
      %1400 = vrot.lane.b32.xlu0 %v1197, 20
      %v1401 = vpop.permute.xlu0 %1400
      %1402 = vrot.lane.b32.xlu0 %v1198, 20
      %v1403 = vpop.permute.xlu0 %1402
      %1404 = vrot.lane.b32.xlu0 %v1199, 20
      %v1405 = vpop.permute.xlu0 %1404
      %1406 = vrot.lane.b32.xlu0 %v1200, 20
      %v1407 = vpop.permute.xlu0 %1406
      %1408 = vrot.lane.b32.xlu0 %v1201, 20
      %v1409 = vpop.permute.xlu0 %1408
      %1410 = vrot.lane.b32.xlu0 %v1202, 20
      %v1411 = vpop.permute.xlu0 %1410
      %1412 = vrot.lane.b32.xlu0 %v1203, 20
      %v1413 = vpop.permute.xlu0 %1412
      %1414 = vrot.lane.b32.xlu0 %v1204, 20
      %v1415 = vpop.permute.xlu0 %1414
      %1416 = vrot.lane.b32.xlu0 %v1205, 20
      %v1417 = vpop.permute.xlu0 %1416
      %1418 = vrot.lane.b32.xlu0 %v1206, 20
      %v1419 = vpop.permute.xlu0 %1418
      %1420 = vrot.lane.b32.xlu0 %v1207, 20
      %v1421 = vpop.permute.xlu0 %1420
      %1422 = vrot.lane.b32.xlu0 %v1210, 20
      %v1423 = vpop.permute.xlu0 %1422
      %1425 = vrot.lane.b32.xlu0 %v1162, 24
      %v1426 = vpop.permute.xlu0 %1425
      %1427 = vrot.lane.b32.xlu0 %v1163, 24
      %v1428 = vpop.permute.xlu0 %1427
      %1429 = vrot.lane.b32.xlu0 %v1164, 24
      %v1430 = vpop.permute.xlu0 %1429
      %1431 = vrot.lane.b32.xlu0 %v1165, 24
      %v1432 = vpop.permute.xlu0 %1431
      %1433 = vrot.lane.b32.xlu0 %v1166, 24
      %v1434 = vpop.permute.xlu0 %1433
      %1435 = vrot.lane.b32.xlu0 %v1167, 24
      %v1436 = vpop.permute.xlu0 %1435
      %1437 = vrot.lane.b32.xlu0 %v1168, 24
      %v1438 = vpop.permute.xlu0 %1437
      %1439 = vrot.lane.b32.xlu0 %v1169, 24
      %v1440 = vpop.permute.xlu0 %1439
      %1441 = vrot.lane.b32.xlu0 %v1170, 24
      %v1442 = vpop.permute.xlu0 %1441
      %1443 = vrot.lane.b32.xlu0 %v1171, 24
      %v1444 = vpop.permute.xlu0 %1443
      %1445 = vrot.lane.b32.xlu0 %v1172, 24
      %v1446 = vpop.permute.xlu0 %1445
      %1447 = vrot.lane.b32.xlu0 %v1173, 24
      %v1448 = vpop.permute.xlu0 %1447
      %1449 = vrot.lane.b32.xlu0 %v1174, 24
      %v1450 = vpop.permute.xlu0 %1449
      %1451 = vrot.lane.b32.xlu0 %v1175, 24
      %v1452 = vpop.permute.xlu0 %1451
      %1453 = vrot.lane.b32.xlu0 %v1208, 24
      %v1454 = vpop.permute.xlu0 %1453
      %1455 = vrot.lane.b32.xlu0 %v1211, 24
      %v1456 = vpop.permute.xlu0 %1455
      %1458 = vrot.lane.b32.xlu0 %v1178, 28
      %v1459 = vpop.permute.xlu0 %1458
      %1460 = vrot.lane.b32.xlu0 %v1179, 28
      %v1461 = vpop.permute.xlu0 %1460
      %1462 = vrot.lane.b32.xlu0 %v1180, 28
      %v1463 = vpop.permute.xlu0 %1462
      %1464 = vrot.lane.b32.xlu0 %v1181, 28
      %v1465 = vpop.permute.xlu0 %1464
      %1466 = vrot.lane.b32.xlu0 %v1182, 28
      %v1467 = vpop.permute.xlu0 %1466
      %1468 = vrot.lane.b32.xlu0 %v1183, 28
      %v1469 = vpop.permute.xlu0 %1468
      %1470 = vrot.lane.b32.xlu0 %v1184, 28
      %v1471 = vpop.permute.xlu0 %1470
      %1472 = vrot.lane.b32.xlu0 %v1185, 28
      %v1473 = vpop.permute.xlu0 %1472
      %1474 = vrot.lane.b32.xlu0 %v1186, 28
      %v1475 = vpop.permute.xlu0 %1474
      %1476 = vrot.lane.b32.xlu0 %v1187, 28
      %v1477 = vpop.permute.xlu0 %1476
      %1478 = vrot.lane.b32.xlu0 %v1188, 28
      %v1479 = vpop.permute.xlu0 %1478
      %1480 = vrot.lane.b32.xlu0 %v1189, 28
      %v1481 = vpop.permute.xlu0 %1480
      %1482 = vrot.lane.b32.xlu0 %v1190, 28
      %v1483 = vpop.permute.xlu0 %1482
      %1484 = vrot.lane.b32.xlu0 %v1191, 28
      %v1485 = vpop.permute.xlu0 %1484
      %1486 = vrot.lane.b32.xlu0 %v1209, 28
      %v1487 = vpop.permute.xlu0 %1486
      %1488 = vrot.lane.b32.xlu0 %v1212, 28
      %v1489 = vpop.permute.xlu0 %1488
      %1491 = vrot.lane.b32.xlu0 %v1194, 32
      %v1492 = vpop.permute.xlu0 %1491
      %1493 = vrot.lane.b32.xlu0 %v1195, 32
      %v1494 = vpop.permute.xlu0 %1493
      %1495 = vrot.lane.b32.xlu0 %v1196, 32
      %v1496 = vpop.permute.xlu0 %1495
      %1497 = vrot.lane.b32.xlu0 %v1197, 32
      %v1498 = vpop.permute.xlu0 %1497
      %1499 = vrot.lane.b32.xlu0 %v1198, 32
      %v1500 = vpop.permute.xlu0 %1499
      %1501 = vrot.lane.b32.xlu0 %v1199, 32
      %v1502 = vpop.permute.xlu0 %1501
      %1503 = vrot.lane.b32.xlu0 %v1200, 32
      %v1504 = vpop.permute.xlu0 %1503
      %1505 = vrot.lane.b32.xlu0 %v1201, 32
      %v1506 = vpop.permute.xlu0 %1505
      %1507 = vrot.lane.b32.xlu0 %v1202, 32
      %v1508 = vpop.permute.xlu0 %1507
      %1509 = vrot.lane.b32.xlu0 %v1203, 32
      %v1510 = vpop.permute.xlu0 %1509
      %1511 = vrot.lane.b32.xlu0 %v1204, 32
      %v1512 = vpop.permute.xlu0 %1511
      %1513 = vrot.lane.b32.xlu0 %v1205, 32
      %v1514 = vpop.permute.xlu0 %1513
      %1515 = vrot.lane.b32.xlu0 %v1206, 32
      %v1516 = vpop.permute.xlu0 %1515
      %1517 = vrot.lane.b32.xlu0 %v1207, 32
      %v1518 = vpop.permute.xlu0 %1517
      %1519 = vrot.lane.b32.xlu0 %v1210, 32
      %v1520 = vpop.permute.xlu0 %1519
      %1521 = vrot.lane.b32.xlu0 %v1213, 32
      %v1522 = vpop.permute.xlu0 %1521
      %v1525 = vsel %vm664, %v1160, %v1231
      %v1528 = vsel %vm664, %v1161, %v1233
      %v1531 = vsel %vm664, %v1162, %v1235
      %v1534 = vsel %vm664, %v1163, %v1237
      %v1537 = vsel %vm664, %v1164, %v1239
      %v1540 = vsel %vm664, %v1165, %v1241
      %v1543 = vsel %vm664, %v1166, %v1243
      %v1546 = vsel %vm664, %v1167, %v1245
      %v1549 = vsel %vm664, %v1168, %v1247
      %v1552 = vsel %vm664, %v1169, %v1249
      %v1555 = vsel %vm664, %v1170, %v1251
      %v1558 = vsel %vm664, %v1171, %v1253
      %v1561 = vsel %vm664, %v1172, %v1255
      %v1564 = vsel %vm664, %v1173, %v1257
      %v1567 = vsel %vm664, %v1174, %v1259
      %v1570 = vsel %vm664, %v1175, %v1261
      %vm1571 = vcmask 64512
      %v1573 = vsel %vm1571, %v1525, %v1279
      %v1575 = vsel %vm1571, %v1528, %v1281
      %v1577 = vsel %vm1571, %v1531, %v1283
      %v1579 = vsel %vm1571, %v1534, %v1285
      %v1581 = vsel %vm1571, %v1537, %v1287
      %v1583 = vsel %vm1571, %v1540, %v1289
      %v1585 = vsel %vm1571, %v1543, %v1291
      %v1587 = vsel %vm1571, %v1546, %v1293
      %v1589 = vsel %vm1571, %v1549, %v1295
      %v1591 = vsel %vm1571, %v1552, %v1297
      %v1593 = vsel %vm1571, %v1555, %v1299
      %v1595 = vsel %vm1571, %v1558, %v1301
      %v1597 = vsel %vm1571, %v1561, %v1303
      %v1599 = vsel %vm1571, %v1564, %v1305
      %v1601 = vsel %vm1571, %v1567, %v1307
      %v1603 = vsel %vm1571, %v1570, %v1309
      %vm1604 = vcmask 97280
      %v1606 = vsel %vm1604, %v1573, %v1327
      %v1608 = vsel %vm1604, %v1575, %v1329
      %v1610 = vsel %vm1604, %v1577, %v1331
      %v1612 = vsel %vm1604, %v1579, %v1333
      %v1614 = vsel %vm1604, %v1581, %v1335
      %v1616 = vsel %vm1604, %v1583, %v1337
      %v1618 = vsel %vm1604, %v1585, %v1339
      %v1620 = vsel %vm1604, %v1587, %v1341
      %v1622 = vsel %vm1604, %v1589, %v1343
      %v1624 = vsel %vm1604, %v1591, %v1345
      %v1626 = vsel %vm1604, %v1593, %v1347
      %v1628 = vsel %vm1604, %v1595, %v1349
      %v1630 = vsel %vm1604, %v1597, %v1351
      %v1632 = vsel %vm1604, %v1599, %v1353
      %v1634 = vsel %vm1604, %v1601, %v1355
      %v1636 = vsel %vm1604, %v1603, %v1357
      %v1638 = vsel %vm407, %v1606, %v1360
      %v1640 = vsel %vm407, %v1608, %v1362
      %v1642 = vsel %vm407, %v1610, %v1364
      %v1644 = vsel %vm407, %v1612, %v1366
      %v1646 = vsel %vm407, %v1614, %v1368
      %v1648 = vsel %vm407, %v1616, %v1370
      %v1650 = vsel %vm407, %v1618, %v1372
      %v1652 = vsel %vm407, %v1620, %v1374
      %v1654 = vsel %vm407, %v1622, %v1376
      %v1656 = vsel %vm407, %v1624, %v1378
      %v1658 = vsel %vm407, %v1626, %v1380
      %v1660 = vsel %vm407, %v1628, %v1382
      %v1662 = vsel %vm407, %v1630, %v1384
      %v1664 = vsel %vm407, %v1632, %v1386
      %v1666 = vsel %vm407, %v1634, %v1388
      %v1668 = vsel %vm407, %v1636, %v1390
      %vm1669 = vcmask 162816
      %v1671 = vsel %vm1669, %v1638, %v1393
      %v1673 = vsel %vm1669, %v1640, %v1395
      %v1675 = vsel %vm1669, %v1642, %v1397
      %v1677 = vsel %vm1669, %v1644, %v1399
      %v1679 = vsel %vm1669, %v1646, %v1401
      %v1681 = vsel %vm1669, %v1648, %v1403
      %v1683 = vsel %vm1669, %v1650, %v1405
      %v1685 = vsel %vm1669, %v1652, %v1407
      %v1687 = vsel %vm1669, %v1654, %v1409
      %v1689 = vsel %vm1669, %v1656, %v1411
      %v1691 = vsel %vm1669, %v1658, %v1413
      %v1693 = vsel %vm1669, %v1660, %v1415
      %v1695 = vsel %vm1669, %v1662, %v1417
      %v1697 = vsel %vm1669, %v1664, %v1419
      %v1699 = vsel %vm1669, %v1666, %v1421
      %v1701 = vsel %vm1669, %v1668, %v1423
      %vm1702 = vcmask 195584
      %v1704 = vsel %vm1702, %v1671, %v1426
      %v1706 = vsel %vm1702, %v1673, %v1428
      %v1708 = vsel %vm1702, %v1675, %v1430
      %v1710 = vsel %vm1702, %v1677, %v1432
      %v1712 = vsel %vm1702, %v1679, %v1434
      %v1714 = vsel %vm1702, %v1681, %v1436
      %v1716 = vsel %vm1702, %v1683, %v1438
      %v1718 = vsel %vm1702, %v1685, %v1440
      %v1720 = vsel %vm1702, %v1687, %v1442
      %v1722 = vsel %vm1702, %v1689, %v1444
      %v1724 = vsel %vm1702, %v1691, %v1446
      %v1726 = vsel %vm1702, %v1693, %v1448
      %v1728 = vsel %vm1702, %v1695, %v1450
      %v1730 = vsel %vm1702, %v1697, %v1452
      %v1732 = vsel %vm1702, %v1699, %v1454
      %v1734 = vsel %vm1702, %v1701, %v1456
      %vm1735 = vcmask 228352
      %v1737 = vsel %vm1735, %v1704, %v1459
      %v1739 = vsel %vm1735, %v1706, %v1461
      %v1741 = vsel %vm1735, %v1708, %v1463
      %v1743 = vsel %vm1735, %v1710, %v1465
      %v1745 = vsel %vm1735, %v1712, %v1467
      %v1747 = vsel %vm1735, %v1714, %v1469
      %v1749 = vsel %vm1735, %v1716, %v1471
      %v1751 = vsel %vm1735, %v1718, %v1473
      %v1753 = vsel %vm1735, %v1720, %v1475
      %v1755 = vsel %vm1735, %v1722, %v1477
      %v1757 = vsel %vm1735, %v1724, %v1479
      %v1759 = vsel %vm1735, %v1726, %v1481
      %v1761 = vsel %vm1735, %v1728, %v1483
      %v1763 = vsel %vm1735, %v1730, %v1485
      %v1765 = vsel %vm1735, %v1732, %v1487
      %v1767 = vsel %vm1735, %v1734, %v1489
      %vm1768 = vcmask 261120
      %v1770 = vsel %vm1768, %v1737, %v1492
      %v1772 = vsel %vm1768, %v1739, %v1494
      %v1774 = vsel %vm1768, %v1741, %v1496
      %v1776 = vsel %vm1768, %v1743, %v1498
      %v1778 = vsel %vm1768, %v1745, %v1500
      %v1780 = vsel %vm1768, %v1747, %v1502
      %v1782 = vsel %vm1768, %v1749, %v1504
      %v1784 = vsel %vm1768, %v1751, %v1506
      %v1786 = vsel %vm1768, %v1753, %v1508
      %v1788 = vsel %vm1768, %v1755, %v1510
      %v1790 = vsel %vm1768, %v1757, %v1512
      %v1792 = vsel %vm1768, %v1759, %v1514
      %v1794 = vsel %vm1768, %v1761, %v1516
      %v1796 = vsel %vm1768, %v1763, %v1518
      %v1798 = vsel %vm1768, %v1765, %v1520
      %v1800 = vsel %vm1768, %v1767, %v1522
      %v1801 = vld [vmem:[%s3] sm:$0xf]
      %v1802 = vld [vmem:[%s3 + $0x4] sm:$0xf]
      %v1803 = vld [vmem:[%s3 + $0x8] sm:$0xf]
      %v1804 = vld [vmem:[%s3 + $0xc] sm:$0xf]
      %v1805 = vld [vmem:[%s3 + $0x10] sm:$0x3]
      %v1806 = vld [vmem:[%s4] sm:$0x1]
      %v1808 = vlaneseq
      %v1809 = vshrl.u32 %v1808, 7
      %v1810 = vsub.s32 0, %v1809
      %v1811 = vrot.slane %v1806, %v1810
      %v1818 = vunpack.c.l.b16 %v1801
      %v1819 = vunpack.c.l.b16 %v1802
      %v1820 = vunpack.c.l.b16 %v1803
      %v1821 = vunpack.c.l.b16 %v1804
      %v1822 = vunpack.c.l.b16 %v1805
      %v1823 = vpack.c.b16 %v1819, %v1818
      %v1824 = vpack.c.b16 %v1821, %v1820
      %v1825 = vpack.c.b16 %v1822, %v1822
      %vm1828 = vcmask 293888
      %v1829 = vsel %vm1828, %v1770, 0
      %v1831 = vsel %vm1828, %v1772, 0
      %v1833 = vsel %vm1828, %v1774, 0
      %v1835 = vsel %vm1828, %v1776, 0
      %v1837 = vsel %vm1828, %v1778, 0
      %v1839 = vsel %vm1828, %v1780, 0
      %v1841 = vsel %vm1828, %v1782, 0
      %v1843 = vsel %vm1828, %v1784, 0
      %v1845 = vsel %vm1828, %v1786, 0
      %v1847 = vsel %vm1828, %v1788, 0
      %v1849 = vsel %vm1828, %v1790, 0
      %v1851 = vsel %vm1828, %v1792, 0
      %v1853 = vsel %vm1828, %v1794, 0
      %v1855 = vsel %vm1828, %v1796, 0
      %v1857 = vsel %vm1828, %v1798, 0
      %v1859 = vsel %vm1828, %v1800, 0
      %vm1861 = vcmask 1041408
      %v1863 = vsel %vm1861, %v1825, 0
      %1865 = vmatprep.subr.bf16.mxu0 0
      %1866 = vmatpush1.bf16.msra.mxu0 %v1823
      %1867 = vmatprep.subr.bf16.mxu0 0
      %1868 = vmatpush1.bf16.msra.mxu0 %v1824
      %1869 = vmatprep.subr.bf16.mxu0 0
      %1870 = vmatpush1.bf16.msra.mxu0 %v1863
      %1871 = vmatprep.subr.bf16.mxu0 0
      %1872 = vmatpush1.bf16.msra.mxu0 0
      %1873 = vmatprep.subr.bf16.mxu0 0
      %1874 = vmatpush1.bf16.msra.mxu0 0
      %1875 = vmatprep.subr.bf16.mxu0 0
      %1876 = vmatpush1.bf16.msra.mxu0 0
      %1877 = vmatprep.subr.bf16.mxu0 0
      %1878 = vmatpush1.bf16.msra.mxu0 0
      %1879 = vmatprep.subr.bf16.mxu0 0
      %1880 = vmatpush1.bf16.msra.mxu0 0
      %1881 = vmatprep.subr.bf16.mxu0 0
      %1882 = vmatpush1.bf16.msra.mxu0 0
      %1883 = vmatprep.subr.bf16.mxu0 0
      %1884 = vmatpush1.bf16.msra.mxu0 0
      %1885 = vmatprep.subr.bf16.mxu0 0
      %1886 = vmatpush1.bf16.msra.mxu0 0
      %1887 = vmatprep.subr.bf16.mxu0 0
      %1888 = vmatpush1.bf16.msra.mxu0 0
      %1889 = vmatprep.subr.bf16.mxu0 0
      %1890 = vmatpush1.bf16.msra.mxu0 0
      %1891 = vmatprep.subr.bf16.mxu0 0
      %1892 = vmatpush1.bf16.msra.mxu0 0
      %1893 = vmatprep.subr.bf16.mxu0 0
      %1894 = vmatpush1.bf16.msra.mxu0 0
      %1895 = vmatprep.subr.bf16.mxu0 0
      %1896 = vmatpush1.bf16.msra.mxu0 0
      %1897 = vmatprep.mubr.bf16.mxu0 0
      %1898 = vmatmul.mubr.bf16.gmra.mrb[0].mxu0 %v1829
      %v1899 = vpop.f32.mrb[0].mxu0
      %v1900 = vadd.f32 %v1811, %v1899
      %v1901 = vpop.f32.mrb[0].mxu0
      %v1902 = vpop.f32.mrb[0].mxu0
      %v1903 = vadd.f32 %v1811, %v1902
      %v1904 = vpop.f32.mrb[0].mxu0
      %1905 = vmatprep.mubr.bf16.mxu0 0
      %1906 = vmatmul.mubr.bf16.gmra.mrb[0].mxu0 %v1831
      %v1907 = vpop.f32.mrb[0].mxu0
      %v1908 = vadd.f32 %v1811, %v1907
      %v1909 = vpop.f32.mrb[0].mxu0
      %v1910 = vpop.f32.mrb[0].mxu0
      %v1911 = vadd.f32 %v1811, %v1910
      %v1912 = vpop.f32.mrb[0].mxu0
      %1913 = vmatprep.mubr.bf16.mxu0 0
      %1914 = vmatmul.mubr.bf16.gmra.mrb[0].mxu0 %v1833
      %v1915 = vpop.f32.mrb[0].mxu0
      %v1916 = vadd.f32 %v1811, %v1915
      %v1917 = vpop.f32.mrb[0].mxu0
      %v1918 = vpop.f32.mrb[0].mxu0
      %v1919 = vadd.f32 %v1811, %v1918
      %v1920 = vpop.f32.mrb[0].mxu0
      %1921 = vmatprep.mubr.bf16.mxu0 0
      %1922 = vmatmul.mubr.bf16.gmra.mrb[0].mxu0 %v1835
      %v1923 = vpop.f32.mrb[0].mxu0
      %v1924 = vadd.f32 %v1811, %v1923
      %v1925 = vpop.f32.mrb[0].mxu0
      %v1926 = vpop.f32.mrb[0].mxu0
      %v1927 = vadd.f32 %v1811, %v1926
      %v1928 = vpop.f32.mrb[0].mxu0
      %1929 = vmatprep.mubr.bf16.mxu0 0
      %1930 = vmatmul.mubr.bf16.gmra.mrb[0].mxu0 %v1837
      %v1931 = vpop.f32.mrb[0].mxu0
      %v1932 = vadd.f32 %v1811, %v1931
      %v1933 = vpop.f32.mrb[0].mxu0
      %v1934 = vpop.f32.mrb[0].mxu0
      %v1935 = vadd.f32 %v1811, %v1934
      %v1936 = vpop.f32.mrb[0].mxu0
      %1937 = vmatprep.mubr.bf16.mxu0 0
      %1938 = vmatmul.mubr.bf16.gmra.mrb[0].mxu0 %v1839
      %v1939 = vpop.f32.mrb[0].mxu0
      %v1940 = vadd.f32 %v1811, %v1939
      %v1941 = vpop.f32.mrb[0].mxu0
      %v1942 = vpop.f32.mrb[0].mxu0
      %v1943 = vadd.f32 %v1811, %v1942
      %v1944 = vpop.f32.mrb[0].mxu0
      %1945 = vmatprep.mubr.bf16.mxu0 0
      %1946 = vmatmul.mubr.bf16.gmra.mrb[0].mxu0 %v1841
      %v1947 = vpop.f32.mrb[0].mxu0
      %v1948 = vadd.f32 %v1811, %v1947
      %v1949 = vpop.f32.mrb[0].mxu0
      %v1950 = vpop.f32.mrb[0].mxu0
      %v1951 = vadd.f32 %v1811, %v1950
      %v1952 = vpop.f32.mrb[0].mxu0
      %1953 = vmatprep.mubr.bf16.mxu0 0
      %1954 = vmatmul.mubr.bf16.gmra.mrb[0].mxu0 %v1843
      %v1955 = vpop.f32.mrb[0].mxu0
      %v1956 = vadd.f32 %v1811, %v1955
      %v1957 = vpop.f32.mrb[0].mxu0
      %v1958 = vpop.f32.mrb[0].mxu0
      %v1959 = vadd.f32 %v1811, %v1958
      %v1960 = vpop.f32.mrb[0].mxu0
      %1961 = vmatprep.mubr.bf16.mxu0 0
      %1962 = vmatmul.mubr.bf16.gmra.mrb[0].mxu0 %v1845
      %v1963 = vpop.f32.mrb[0].mxu0
      %v1964 = vadd.f32 %v1811, %v1963
      %v1965 = vpop.f32.mrb[0].mxu0
      %v1966 = vpop.f32.mrb[0].mxu0
      %v1967 = vadd.f32 %v1811, %v1966
      %v1968 = vpop.f32.mrb[0].mxu0
      %1969 = vmatprep.mubr.bf16.mxu0 0
      %1970 = vmatmul.mubr.bf16.gmra.mrb[0].mxu0 %v1847
      %v1971 = vpop.f32.mrb[0].mxu0
      %v1972 = vadd.f32 %v1811, %v1971
      %v1973 = vpop.f32.mrb[0].mxu0
      %v1974 = vpop.f32.mrb[0].mxu0
      %v1975 = vadd.f32 %v1811, %v1974
      %v1976 = vpop.f32.mrb[0].mxu0
      %1977 = vmatprep.mubr.bf16.mxu0 0
      %1978 = vmatmul.mubr.bf16.gmra.mrb[0].mxu0 %v1849
      %v1979 = vpop.f32.mrb[0].mxu0
      %v1980 = vadd.f32 %v1811, %v1979
      %v1981 = vpop.f32.mrb[0].mxu0
      %v1982 = vpop.f32.mrb[0].mxu0
      %v1983 = vadd.f32 %v1811, %v1982
      %v1984 = vpop.f32.mrb[0].mxu0
      %1985 = vmatprep.mubr.bf16.mxu0 0
      %1986 = vmatmul.mubr.bf16.gmra.mrb[0].mxu0 %v1851
      %v1987 = vpop.f32.mrb[0].mxu0
      %v1988 = vadd.f32 %v1811, %v1987
      %v1989 = vpop.f32.mrb[0].mxu0
      %v1990 = vpop.f32.mrb[0].mxu0
      %v1991 = vadd.f32 %v1811, %v1990
      %v1992 = vpop.f32.mrb[0].mxu0
      %1993 = vmatprep.mubr.bf16.mxu0 0
      %1994 = vmatmul.mubr.bf16.gmra.mrb[0].mxu0 %v1853
      %v1995 = vpop.f32.mrb[0].mxu0
      %v1996 = vadd.f32 %v1811, %v1995
      %v1997 = vpop.f32.mrb[0].mxu0
      %v1998 = vpop.f32.mrb[0].mxu0
      %v1999 = vadd.f32 %v1811, %v1998
      %v2000 = vpop.f32.mrb[0].mxu0
      %2001 = vmatprep.mubr.bf16.mxu0 0
      %2002 = vmatmul.mubr.bf16.gmra.mrb[0].mxu0 %v1855
      %v2003 = vpop.f32.mrb[0].mxu0
      %v2004 = vadd.f32 %v1811, %v2003
      %v2005 = vpop.f32.mrb[0].mxu0
      %v2006 = vpop.f32.mrb[0].mxu0
      %v2007 = vadd.f32 %v1811, %v2006
      %v2008 = vpop.f32.mrb[0].mxu0
      %2009 = vmatprep.mubr.bf16.mxu0 0
      %2010 = vmatmul.mubr.bf16.gmra.mrb[0].mxu0 %v1857
      %v2011 = vpop.f32.mrb[0].mxu0
      %v2012 = vadd.f32 %v1811, %v2011
      %v2013 = vpop.f32.mrb[0].mxu0
      %v2014 = vpop.f32.mrb[0].mxu0
      %v2015 = vadd.f32 %v1811, %v2014
      %v2016 = vpop.f32.mrb[0].mxu0
      %2017 = vmatprep.mubr.bf16.mxu0 0
      %2018 = vmatmul.mubr.bf16.gmra.mrb[0].mxu0 %v1859
      %v2019 = vpop.f32.mrb[0].mxu0
      %v2020 = vadd.f32 %v1811, %v2019
      %v2021 = vpop.f32.mrb[0].mxu0
      %v2022 = vpop.f32.mrb[0].mxu0
      %v2023 = vadd.f32 %v1811, %v2022
      %v2024 = vpop.f32.mrb[0].mxu0
      %2025 = vdwg.mxu0
      %v2026 = vmax.f32 %v1900, 0.0
      %v2027 = vmax.f32 %v1903, 0.0
      %v2028 = vmax.f32 %v1908, 0.0
      %v2029 = vmax.f32 %v1911, 0.0
      %v2030 = vmax.f32 %v1916, 0.0
      %v2031 = vmax.f32 %v1919, 0.0
      %v2032 = vmax.f32 %v1924, 0.0
      %v2033 = vmax.f32 %v1927, 0.0
      %v2034 = vmax.f32 %v1932, 0.0
      %v2035 = vmax.f32 %v1935, 0.0
      %v2036 = vmax.f32 %v1940, 0.0
      %v2037 = vmax.f32 %v1943, 0.0
      %v2038 = vmax.f32 %v1948, 0.0
      %v2039 = vmax.f32 %v1951, 0.0
      %v2040 = vmax.f32 %v1956, 0.0
      %v2041 = vmax.f32 %v1959, 0.0
      %v2042 = vmax.f32 %v1964, 0.0
      %v2043 = vmax.f32 %v1967, 0.0
      %v2044 = vmax.f32 %v1972, 0.0
      %v2045 = vmax.f32 %v1975, 0.0
      %v2046 = vmax.f32 %v1980, 0.0
      %v2047 = vmax.f32 %v1983, 0.0
      %v2048 = vmax.f32 %v1988, 0.0
      %v2049 = vmax.f32 %v1991, 0.0
      %v2050 = vmax.f32 %v1996, 0.0
      %v2051 = vmax.f32 %v1999, 0.0
      %v2052 = vmax.f32 %v2004, 0.0
      %v2053 = vmax.f32 %v2007, 0.0
      %v2054 = vmax.f32 %v2012, 0.0
      %v2055 = vmax.f32 %v2015, 0.0
      %v2056 = vmax.f32 %v2020, 0.0
      %v2057 = vmax.f32 %v2023, 0.0
      %v2058 = vpack.c.bf16 %v2027, %v2026
      %v2059 = vpack.c.bf16 %v2029, %v2028
      %v2060 = vpack.c.bf16 %v2031, %v2030
      %v2061 = vpack.c.bf16 %v2033, %v2032
      %v2062 = vpack.c.bf16 %v2035, %v2034
      %v2063 = vpack.c.bf16 %v2037, %v2036
      %v2064 = vpack.c.bf16 %v2039, %v2038
      %v2065 = vpack.c.bf16 %v2041, %v2040
      %v2066 = vpack.c.bf16 %v2043, %v2042
      %v2067 = vpack.c.bf16 %v2045, %v2044
      %v2068 = vpack.c.bf16 %v2047, %v2046
      %v2069 = vpack.c.bf16 %v2049, %v2048
      %v2070 = vpack.c.bf16 %v2051, %v2050
      %v2071 = vpack.c.bf16 %v2053, %v2052
      %v2072 = vpack.c.bf16 %v2055, %v2054
      %v2073 = vpack.c.bf16 %v2057, %v2056
      %v2074 = vld [vmem:[%s5] sm:$0x3]
      %v2075 = vld [vmem:[%s6] sm:$0x1]
      %v2077 = vlaneseq
      %v2078 = vshrl.u32 %v2077, 7
      %v2079 = vsub.s32 0, %v2078
      %v2080 = vrot.slane %v2075, %v2079
      %v2083 = vsel %vm664, %v2058, 0
      %v2086 = vsel %vm664, %v2059, 0
      %v2089 = vsel %vm664, %v2060, 0
      %v2092 = vsel %vm664, %v2061, 0
      %v2095 = vsel %vm664, %v2062, 0
      %v2098 = vsel %vm664, %v2063, 0
      %v2101 = vsel %vm664, %v2064, 0
      %v2104 = vsel %vm664, %v2065, 0
      %v2107 = vsel %vm664, %v2066, 0
      %v2110 = vsel %vm664, %v2067, 0
      %v2113 = vsel %vm664, %v2068, 0
      %v2116 = vsel %vm664, %v2069, 0
      %v2119 = vsel %vm664, %v2070, 0
      %v2122 = vsel %vm664, %v2071, 0
      %v2125 = vsel %vm664, %v2072, 0
      %v2128 = vsel %vm664, %v2073, 0
      %v2131 = vsel %vm1861, %v2074, 0
      %2133 = vmatprep.subr.bf16.mxu0 0
      %2134 = vmatpush1.bf16.msra.mxu0 %v2131
      %2135 = vmatprep.subr.bf16.mxu0 0
      %2136 = vmatpush1.bf16.msra.mxu0 0
      %2137 = vmatprep.subr.bf16.mxu0 0
      %2138 = vmatpush1.bf16.msra.mxu0 0
      %2139 = vmatprep.subr.bf16.mxu0 0
      %2140 = vmatpush1.bf16.msra.mxu0 0
      %2141 = vmatprep.subr.bf16.mxu0 0
      %2142 = vmatpush1.bf16.msra.mxu0 0
      %2143 = vmatprep.subr.bf16.mxu0 0
      %2144 = vmatpush1.bf16.msra.mxu0 0
      %2145 = vmatprep.subr.bf16.mxu0 0
      %2146 = vmatpush1.bf16.msra.mxu0 0
      %2147 = vmatprep.subr.bf16.mxu0 0
      %2148 = vmatpush1.bf16.msra.mxu0 0
      %2149 = vmatprep.subr.bf16.mxu0 0
      %2150 = vmatpush1.bf16.msra.mxu0 0
      %2151 = vmatprep.subr.bf16.mxu0 0
      %2152 = vmatpush1.bf16.msra.mxu0 0
      %2153 = vmatprep.subr.bf16.mxu0 0
      %2154 = vmatpush1.bf16.msra.mxu0 0
      %2155 = vmatprep.subr.bf16.mxu0 0
      %2156 = vmatpush1.bf16.msra.mxu0 0
      %2157 = vmatprep.subr.bf16.mxu0 0
      %2158 = vmatpush1.bf16.msra.mxu0 0
      %2159 = vmatprep.subr.bf16.mxu0 0
      %2160 = vmatpush1.bf16.msra.mxu0 0
      %2161 = vmatprep.subr.bf16.mxu0 0
      %2162 = vmatpush1.bf16.msra.mxu0 0
      %2163 = vmatprep.subr.bf16.mxu0 0
      %2164 = vmatpush1.bf16.msra.mxu0 0
      %2165 = vmatprep.mubr.bf16.mxu0 0
      %2166 = vmatmul.mubr.bf16.gmra.mrb[0].mxu0 %v2083
      %v2167 = vpop.f32.mrb[0].mxu0
      %v2168 = vadd.f32 %v2080, %v2167
      %v2169 = vpop.f32.mrb[0].mxu0
      %v2170 = vpop.f32.mrb[0].mxu0
      %v2171 = vadd.f32 %v2080, %v2170
      %v2172 = vpop.f32.mrb[0].mxu0
      %2173 = vmatprep.mubr.bf16.mxu0 0
      %2174 = vmatmul.mubr.bf16.gmra.mrb[0].mxu0 %v2086
      %v2175 = vpop.f32.mrb[0].mxu0
      %v2176 = vadd.f32 %v2080, %v2175
      %v2177 = vpop.f32.mrb[0].mxu0
      %v2178 = vpop.f32.mrb[0].mxu0
      %v2179 = vadd.f32 %v2080, %v2178
      %v2180 = vpop.f32.mrb[0].mxu0
      %2181 = vmatprep.mubr.bf16.mxu0 0
      %2182 = vmatmul.mubr.bf16.gmra.mrb[0].mxu0 %v2089
      %v2183 = vpop.f32.mrb[0].mxu0
      %v2184 = vadd.f32 %v2080, %v2183
      %v2185 = vpop.f32.mrb[0].mxu0
      %v2186 = vpop.f32.mrb[0].mxu0
      %v2187 = vadd.f32 %v2080, %v2186
      %v2188 = vpop.f32.mrb[0].mxu0
      %2189 = vmatprep.mubr.bf16.mxu0 0
      %2190 = vmatmul.mubr.bf16.gmra.mrb[0].mxu0 %v2092
      %v2191 = vpop.f32.mrb[0].mxu0
      %v2192 = vadd.f32 %v2080, %v2191
      %v2193 = vpop.f32.mrb[0].mxu0
      %v2194 = vpop.f32.mrb[0].mxu0
      %v2195 = vadd.f32 %v2080, %v2194
      %v2196 = vpop.f32.mrb[0].mxu0
      %2197 = vmatprep.mubr.bf16.mxu0 0
      %2198 = vmatmul.mubr.bf16.gmra.mrb[0].mxu0 %v2095
      %v2199 = vpop.f32.mrb[0].mxu0
      %v2200 = vadd.f32 %v2080, %v2199
      %v2201 = vpop.f32.mrb[0].mxu0
      %v2202 = vpop.f32.mrb[0].mxu0
      %v2203 = vadd.f32 %v2080, %v2202
      %v2204 = vpop.f32.mrb[0].mxu0
      %2205 = vmatprep.mubr.bf16.mxu0 0
      %2206 = vmatmul.mubr.bf16.gmra.mrb[0].mxu0 %v2098
      %v2207 = vpop.f32.mrb[0].mxu0
      %v2208 = vadd.f32 %v2080, %v2207
      %v2209 = vpop.f32.mrb[0].mxu0
      %v2210 = vpop.f32.mrb[0].mxu0
      %v2211 = vadd.f32 %v2080, %v2210
      %v2212 = vpop.f32.mrb[0].mxu0
      %2213 = vmatprep.mubr.bf16.mxu0 0
      %2214 = vmatmul.mubr.bf16.gmra.mrb[0].mxu0 %v2101
      %v2215 = vpop.f32.mrb[0].mxu0
      %v2216 = vadd.f32 %v2080, %v2215
      %v2217 = vpop.f32.mrb[0].mxu0
      %v2218 = vpop.f32.mrb[0].mxu0
      %v2219 = vadd.f32 %v2080, %v2218
      %v2220 = vpop.f32.mrb[0].mxu0
      %2221 = vmatprep.mubr.bf16.mxu0 0
      %2222 = vmatmul.mubr.bf16.gmra.mrb[0].mxu0 %v2104
      %v2223 = vpop.f32.mrb[0].mxu0
      %v2224 = vadd.f32 %v2080, %v2223
      %v2225 = vpop.f32.mrb[0].mxu0
      %v2226 = vpop.f32.mrb[0].mxu0
      %v2227 = vadd.f32 %v2080, %v2226
      %v2228 = vpop.f32.mrb[0].mxu0
      %2229 = vmatprep.mubr.bf16.mxu0 0
      %2230 = vmatmul.mubr.bf16.gmra.mrb[0].mxu0 %v2107
      %v2231 = vpop.f32.mrb[0].mxu0
      %v2232 = vadd.f32 %v2080, %v2231
      %v2233 = vpop.f32.mrb[0].mxu0
      %v2234 = vpop.f32.mrb[0].mxu0
      %v2235 = vadd.f32 %v2080, %v2234
      %v2236 = vpop.f32.mrb[0].mxu0
      %2237 = vmatprep.mubr.bf16.mxu0 0
      %2238 = vmatmul.mubr.bf16.gmra.mrb[0].mxu0 %v2110
      %v2239 = vpop.f32.mrb[0].mxu0
      %v2240 = vadd.f32 %v2080, %v2239
      %v2241 = vpop.f32.mrb[0].mxu0
      %v2242 = vpop.f32.mrb[0].mxu0
      %v2243 = vadd.f32 %v2080, %v2242
      %v2244 = vpop.f32.mrb[0].mxu0
      %2245 = vmatprep.mubr.bf16.mxu0 0
      %2246 = vmatmul.mubr.bf16.gmra.mrb[0].mxu0 %v2113
      %v2247 = vpop.f32.mrb[0].mxu0
      %v2248 = vadd.f32 %v2080, %v2247
      %v2249 = vpop.f32.mrb[0].mxu0
      %v2250 = vpop.f32.mrb[0].mxu0
      %v2251 = vadd.f32 %v2080, %v2250
      %v2252 = vpop.f32.mrb[0].mxu0
      %2253 = vmatprep.mubr.bf16.mxu0 0
      %2254 = vmatmul.mubr.bf16.gmra.mrb[0].mxu0 %v2116
      %v2255 = vpop.f32.mrb[0].mxu0
      %v2256 = vadd.f32 %v2080, %v2255
      %v2257 = vpop.f32.mrb[0].mxu0
      %v2258 = vpop.f32.mrb[0].mxu0
      %v2259 = vadd.f32 %v2080, %v2258
      %v2260 = vpop.f32.mrb[0].mxu0
      %2261 = vmatprep.mubr.bf16.mxu0 0
      %2262 = vmatmul.mubr.bf16.gmra.mrb[0].mxu0 %v2119
      %v2263 = vpop.f32.mrb[0].mxu0
      %v2264 = vadd.f32 %v2080, %v2263
      %v2265 = vpop.f32.mrb[0].mxu0
      %v2266 = vpop.f32.mrb[0].mxu0
      %v2267 = vadd.f32 %v2080, %v2266
      %v2268 = vpop.f32.mrb[0].mxu0
      %2269 = vmatprep.mubr.bf16.mxu0 0
      %2270 = vmatmul.mubr.bf16.gmra.mrb[0].mxu0 %v2122
      %v2271 = vpop.f32.mrb[0].mxu0
      %v2272 = vadd.f32 %v2080, %v2271
      %v2273 = vpop.f32.mrb[0].mxu0
      %v2274 = vpop.f32.mrb[0].mxu0
      %v2275 = vadd.f32 %v2080, %v2274
      %v2276 = vpop.f32.mrb[0].mxu0
      %2277 = vmatprep.mubr.bf16.mxu0 0
      %2278 = vmatmul.mubr.bf16.gmra.mrb[0].mxu0 %v2125
      %v2279 = vpop.f32.mrb[0].mxu0
      %v2280 = vadd.f32 %v2080, %v2279
      %v2281 = vpop.f32.mrb[0].mxu0
      %v2282 = vpop.f32.mrb[0].mxu0
      %v2283 = vadd.f32 %v2080, %v2282
      %v2284 = vpop.f32.mrb[0].mxu0
      %2285 = vmatprep.mubr.bf16.mxu0 0
      %2286 = vmatmul.mubr.bf16.gmra.mrb[0].mxu0 %v2128
      %v2287 = vpop.f32.mrb[0].mxu0
      %v2288 = vadd.f32 %v2080, %v2287
      %v2289 = vpop.f32.mrb[0].mxu0
      %v2290 = vpop.f32.mrb[0].mxu0
      %v2291 = vadd.f32 %v2080, %v2290
      %v2292 = vpop.f32.mrb[0].mxu0
      %2293 = vdwg.mxu0
      %v2294 = vunpack.c.l.bf16 %v280
      %v2295 = vunpack.c.l.bf16 %v281
      %v2296 = vunpack.c.l.bf16 %v282
      %v2297 = vunpack.c.l.bf16 %v283
      %v2298 = vunpack.c.l.bf16 %v284
      %v2299 = vunpack.c.l.bf16 %v285
      %v2300 = vunpack.c.l.bf16 %v286
      %v2301 = vunpack.c.l.bf16 %v287
      %v2302 = vunpack.c.l.bf16 %v288
      %v2303 = vunpack.c.l.bf16 %v289
      %v2304 = vunpack.c.l.bf16 %v290
      %v2305 = vunpack.c.l.bf16 %v291
      %v2306 = vunpack.c.l.bf16 %v292
      %v2307 = vunpack.c.l.bf16 %v293
      %v2308 = vunpack.c.l.bf16 %v294
      %v2309 = vunpack.c.l.bf16 %v295
      %v2310 = vunpack.c.l.bf16 %v296
      %v2311 = vunpack.c.l.bf16 %v297
      %v2312 = vunpack.c.l.bf16 %v298
      %v2313 = vunpack.c.l.bf16 %v299
      %v2314 = vunpack.c.l.bf16 %v300
      %v2315 = vunpack.c.l.bf16 %v301
      %v2316 = vunpack.c.l.bf16 %v302
      %v2317 = vunpack.c.l.bf16 %v303
      %v2318 = vunpack.c.l.bf16 %v304
      %v2319 = vunpack.c.l.bf16 %v305
      %v2320 = vunpack.c.l.bf16 %v306
      %v2321 = vunpack.c.l.bf16 %v307
      %v2322 = vunpack.c.l.bf16 %v308
      %v2323 = vunpack.c.l.bf16 %v309
      %v2324 = vunpack.c.l.bf16 %v310
      %v2325 = vunpack.c.l.bf16 %v311
      %v2326 = vadd.f32 %v2168, %v2294
      %v2327 = vadd.f32 %v2171, %v2295
      %v2328 = vadd.f32 %v2176, %v2296
      %v2329 = vadd.f32 %v2179, %v2297
      %v2330 = vadd.f32 %v2184, %v2298
      %v2331 = vadd.f32 %v2187, %v2299
      %v2332 = vadd.f32 %v2192, %v2300
      %v2333 = vadd.f32 %v2195, %v2301
      %v2334 = vadd.f32 %v2200, %v2302
      %v2335 = vadd.f32 %v2203, %v2303
      %v2336 = vadd.f32 %v2208, %v2304
      %v2337 = vadd.f32 %v2211, %v2305
      %v2338 = vadd.f32 %v2216, %v2306
      %v2339 = vadd.f32 %v2219, %v2307
      %v2340 = vadd.f32 %v2224, %v2308
      %v2341 = vadd.f32 %v2227, %v2309
      %v2342 = vadd.f32 %v2232, %v2310
      %v2343 = vadd.f32 %v2235, %v2311
      %v2344 = vadd.f32 %v2240, %v2312
      %v2345 = vadd.f32 %v2243, %v2313
      %v2346 = vadd.f32 %v2248, %v2314
      %v2347 = vadd.f32 %v2251, %v2315
      %v2348 = vadd.f32 %v2256, %v2316
      %v2349 = vadd.f32 %v2259, %v2317
      %v2350 = vadd.f32 %v2264, %v2318
      %v2351 = vadd.f32 %v2267, %v2319
      %v2352 = vadd.f32 %v2272, %v2320
      %v2353 = vadd.f32 %v2275, %v2321
      %v2354 = vadd.f32 %v2280, %v2322
      %v2355 = vadd.f32 %v2283, %v2323
      %v2356 = vadd.f32 %v2288, %v2324
      %v2357 = vadd.f32 %v2291, %v2325
      %v2358 = vmax.f32 %v2326, 0.0
      %v2359 = vmax.f32 %v2327, 0.0
      %v2360 = vmax.f32 %v2328, 0.0
      %v2361 = vmax.f32 %v2329, 0.0
      %v2362 = vmax.f32 %v2330, 0.0
      %v2363 = vmax.f32 %v2331, 0.0
      %v2364 = vmax.f32 %v2332, 0.0
      %v2365 = vmax.f32 %v2333, 0.0
      %v2366 = vmax.f32 %v2334, 0.0
      %v2367 = vmax.f32 %v2335, 0.0
      %v2368 = vmax.f32 %v2336, 0.0
      %v2369 = vmax.f32 %v2337, 0.0
      %v2370 = vmax.f32 %v2338, 0.0
      %v2371 = vmax.f32 %v2339, 0.0
      %v2372 = vmax.f32 %v2340, 0.0
      %v2373 = vmax.f32 %v2341, 0.0
      %v2374 = vmax.f32 %v2342, 0.0
      %v2375 = vmax.f32 %v2343, 0.0
      %v2376 = vmax.f32 %v2344, 0.0
      %v2377 = vmax.f32 %v2345, 0.0
      %v2378 = vmax.f32 %v2346, 0.0
      %v2379 = vmax.f32 %v2347, 0.0
      %v2380 = vmax.f32 %v2348, 0.0
      %v2381 = vmax.f32 %v2349, 0.0
      %v2382 = vmax.f32 %v2350, 0.0
      %v2383 = vmax.f32 %v2351, 0.0
      %v2384 = vmax.f32 %v2352, 0.0
      %v2385 = vmax.f32 %v2353, 0.0
      %v2386 = vmax.f32 %v2354, 0.0
      %v2387 = vmax.f32 %v2355, 0.0
      %v2388 = vmax.f32 %v2356, 0.0
      %v2389 = vmax.f32 %v2357, 0.0
      %v2390 = vpack.c.bf16 %v2359, %v2358
      %v2391 = vpack.c.bf16 %v2361, %v2360
      %v2392 = vpack.c.bf16 %v2363, %v2362
      %v2393 = vpack.c.bf16 %v2365, %v2364
      %v2394 = vpack.c.bf16 %v2367, %v2366
      %v2395 = vpack.c.bf16 %v2369, %v2368
      %v2396 = vpack.c.bf16 %v2371, %v2370
      %v2397 = vpack.c.bf16 %v2373, %v2372
      %v2398 = vpack.c.bf16 %v2375, %v2374
      %v2399 = vpack.c.bf16 %v2377, %v2376
      %v2400 = vpack.c.bf16 %v2379, %v2378
      %v2401 = vpack.c.bf16 %v2381, %v2380
      %v2402 = vpack.c.bf16 %v2383, %v2382
      %v2403 = vpack.c.bf16 %v2385, %v2384
      %v2404 = vpack.c.bf16 %v2387, %v2386
      %v2405 = vpack.c.bf16 %v2389, %v2388
      %v2422 = vunpack.c.l.b16 %v2390
      %v2423 = vunpack.c.h.b16 %v2390
      %v2424 = vunpack.c.l.b16 %v2391
      %v2425 = vunpack.c.h.b16 %v2391
      %v2426 = vunpack.c.l.b16 %v2392
      %v2427 = vunpack.c.h.b16 %v2392
      %v2428 = vunpack.c.l.b16 %v2393
      %v2429 = vunpack.c.h.b16 %v2393
      %v2430 = vunpack.c.l.b16 %v2394
      %v2431 = vunpack.c.h.b16 %v2394
      %v2432 = vunpack.c.l.b16 %v2395
      %v2433 = vunpack.c.h.b16 %v2395
      %v2434 = vunpack.c.l.b16 %v2396
      %v2435 = vunpack.c.h.b16 %v2396
      %v2436 = vunpack.c.l.b16 %v2397
      %v2437 = vunpack.c.h.b16 %v2397
      %v2438 = vunpack.c.l.b16 %v2398
      %v2439 = vunpack.c.h.b16 %v2398
      %v2440 = vunpack.c.l.b16 %v2399
      %v2441 = vunpack.c.h.b16 %v2399
      %v2442 = vunpack.c.l.b16 %v2400
      %v2443 = vunpack.c.h.b16 %v2400
      %v2444 = vunpack.c.l.b16 %v2401
      %v2445 = vunpack.c.h.b16 %v2401
      %v2446 = vunpack.c.l.b16 %v2402
      %v2447 = vunpack.c.h.b16 %v2402
      %v2448 = vunpack.c.l.b16 %v2403
      %v2449 = vunpack.c.h.b16 %v2403
      %v2450 = vunpack.c.l.b16 %v2404
      %v2451 = vunpack.c.h.b16 %v2404
      %v2452 = vunpack.c.l.b16 %v2405
      %v2453 = vunpack.c.h.b16 %v2405
      %v2454 = vpack.c.b16 %v2422, %v2422
      %v2455 = vpack.c.b16 %v2423, %v2423
      %v2456 = vpack.c.b16 %v2424, %v2424
      %v2457 = vpack.c.b16 %v2425, %v2425
      %v2458 = vpack.c.b16 %v2426, %v2426
      %v2459 = vpack.c.b16 %v2427, %v2427
      %v2460 = vpack.c.b16 %v2428, %v2428
      %v2461 = vpack.c.b16 %v2429, %v2429
      %v2462 = vpack.c.b16 %v2430, %v2430
      %v2463 = vpack.c.b16 %v2431, %v2431
      %v2464 = vpack.c.b16 %v2432, %v2432
      %v2465 = vpack.c.b16 %v2433, %v2433
      %v2466 = vpack.c.b16 %v2434, %v2434
      %v2467 = vpack.c.b16 %v2435, %v2435
      %v2468 = vpack.c.b16 %v2436, %v2436
      %v2469 = vpack.c.b16 %v2437, %v2437
      %v2470 = vpack.c.b16 %v2438, %v2438
      %v2471 = vpack.c.b16 %v2439, %v2439
      %v2472 = vpack.c.b16 %v2440, %v2440
      %v2473 = vpack.c.b16 %v2441, %v2441
      %v2474 = vpack.c.b16 %v2442, %v2442
      %v2475 = vpack.c.b16 %v2443, %v2443
      %v2476 = vpack.c.b16 %v2444, %v2444
      %v2477 = vpack.c.b16 %v2445, %v2445
      %v2478 = vpack.c.b16 %v2446, %v2446
      %v2479 = vpack.c.b16 %v2447, %v2447
      %v2480 = vpack.c.b16 %v2448, %v2448
      %v2481 = vpack.c.b16 %v2449, %v2449
      %v2482 = vpack.c.b16 %v2450, %v2450
      %v2483 = vpack.c.b16 %v2451, %v2451
      %v2484 = vpack.c.b16 %v2452, %v2452
      %v2485 = vpack.c.b16 %v2453, %v2453
      %vm2518 = vcmask 125952
      %2519 = vst.msk [vmem:[%s278] sm:$0xf] %vm2518, %v2454
      %2520 = vst.msk [vmem:[%s278 + $0x4] sm:$0xf] %vm2518, %v2455
      %2521 = vst.msk [vmem:[%s278 + $0x8] sm:$0xf] %vm2518, %v2456
      %2522 = vst.msk [vmem:[%s278 + $0xc] sm:$0xf] %vm2518, %v2457
      %2523 = vst.msk [vmem:[%s278 + $0x10] sm:$0xf] %vm2518, %v2458
      %2524 = vst.msk [vmem:[%s278 + $0x14] sm:$0xf] %vm2518, %v2459
      %2525 = vst.msk [vmem:[%s278 + $0x18] sm:$0xf] %vm2518, %v2460
      %2526 = vst.msk [vmem:[%s278 + $0x1c] sm:$0xf] %vm2518, %v2461
      %2527 = vst.msk [vmem:[%s278 + $0x20] sm:$0xf] %vm2518, %v2462
      %2528 = vst.msk [vmem:[%s278 + $0x24] sm:$0xf] %vm2518, %v2463
      %2529 = vst.msk [vmem:[%s278 + $0x28] sm:$0xf] %vm2518, %v2464
      %2530 = vst.msk [vmem:[%s278 + $0x2c] sm:$0xf] %vm2518, %v2465
      %2531 = vst.msk [vmem:[%s278 + $0x30] sm:$0xf] %vm2518, %v2466
      %2532 = vst.msk [vmem:[%s278 + $0x34] sm:$0xf] %vm2518, %v2467
      %2533 = vst.msk [vmem:[%s278 + $0x38] sm:$0xf] %vm2518, %v2468
      %2534 = vst.msk [vmem:[%s278 + $0x3c] sm:$0xf] %vm2518, %v2469
      %2535 = vst.msk [vmem:[%s278 + $0x40] sm:$0xf] %vm2518, %v2470
      %2536 = vst.msk [vmem:[%s278 + $0x44] sm:$0xf] %vm2518, %v2471
      %2537 = vst.msk [vmem:[%s278 + $0x48] sm:$0xf] %vm2518, %v2472
      %2538 = vst.msk [vmem:[%s278 + $0x4c] sm:$0xf] %vm2518, %v2473
      %2539 = vst.msk [vmem:[%s278 + $0x50] sm:$0xf] %vm2518, %v2474
      %2540 = vst.msk [vmem:[%s278 + $0x54] sm:$0xf] %vm2518, %v2475
      %2541 = vst.msk [vmem:[%s278 + $0x58] sm:$0xf] %vm2518, %v2476
      %2542 = vst.msk [vmem:[%s278 + $0x5c] sm:$0xf] %vm2518, %v2477
      %2543 = vst.msk [vmem:[%s278 + $0x60] sm:$0xf] %vm2518, %v2478
      %2544 = vst.msk [vmem:[%s278 + $0x64] sm:$0xf] %vm2518, %v2479
      %2545 = vst.msk [vmem:[%s278 + $0x68] sm:$0xf] %vm2518, %v2480
      %2546 = vst.msk [vmem:[%s278 + $0x6c] sm:$0xf] %vm2518, %v2481
      %2547 = vst.msk [vmem:[%s278 + $0x70] sm:$0xf] %vm2518, %v2482
      %2548 = vst.msk [vmem:[%s278 + $0x74] sm:$0xf] %vm2518, %v2483
      %2549 = vst.msk [vmem:[%s278 + $0x78] sm:$0xf] %vm2518, %v2484
      %2550 = vst.msk [vmem:[%s278 + $0x7c] sm:$0xf] %vm2518, %v2485
      %p2551 = scmp.lt.s32.totalorder %s18, 1
      %s2552 = scalar_select %p2551, %s18, 1
      %s2553 = smul.addr %s2552, 32
      %s2554 = smul.addr %s2553, 4
      %s2555 = scalar_lea.vmem %s7, %s2554
      // Predicated region
      $region49: #{tpu_custom_call.1} parent=47 // pred_check
        %p2556 = pneg %p188
      $region50: #{tpu_custom_call.1} parent=47 // pred_check_branch
        %2558 = sbr.rel (%p2556) target = $region52
      $region51: #{tpu_custom_call.1} parent=47 // pred_region
        _
      $region52: #{tpu_custom_call.1} parent=47 // pred_fallthru
        _
    $region48: #{tpu_custom_call.1} parent=5 // pred_fallthru
      _
    %p2559 = scmp.le.s32.totalorder 2, %s13
    // Predicated region
    $region53: #{tpu_custom_call.1} parent=5 // pred_check
      %p2560 = pneg %p2559
    $region54: #{tpu_custom_call.1} parent=5 // pred_check_branch
      %2562 = sbr.rel (%p2560) target = $region56
    $region55: #{tpu_custom_call.1} parent=5 // pred_region
      %s2563 = ssub.s32 %s13, 2
      // Predicated region
      $region57: #{tpu_custom_call.1} parent=55 // pred_check
        %p2564 = pneg %p194
      $region58: #{tpu_custom_call.1} parent=55 // pred_check_branch
        %2566 = sbr.rel (%p2564) target = $region60
      $region59: #{tpu_custom_call.1} parent=55 // pred_region
        %p2567 = scmp.lt.s32.totalorder %s19, 1
        %s2568 = scalar_select %p2567, %s19, 1
        %s2569 = smul.addr %s2568, 32
        %s2570 = smul.addr %s2569, 4
        %s2571 = scalar_lea.vmem %s7, %s2570
      $region60: #{tpu_custom_call.1} parent=55 // pred_fallthru
        _
    $region56: #{tpu_custom_call.1} parent=5 // pred_fallthru
      _
  $region6: #{tpu_custom_call.1} parent=0 // loop_footer
    %s17 = sadd.s32 1, %s13
  $region7: #{tpu_custom_call.1} parent=0 // loop_footer_branch
    %12 = sbr.rel target = $region3
  $region8: #{tpu_custom_call.1} parent=0 // loop_exit
    _

</llo_original>
